<compile_context>
chip_gen: v6e
topology: v6e:2x2x1
jax: 0.10.0
libtpu: 0.0.40
codegen_flags: <defaults>
</compile_context>

<pallas_src>
import jax
import jax.numpy as jnp
from jax.experimental import pallas as pl
from jax.experimental.pallas import tpu as pltpu

OOV_INDEX = -1
LANE = 128
DEFAULT_CHUNK = 8  # timesteps per grid step (multiple of 8 for aligned stores)


# ----------------------------------------------------------------------------
# Kernel: one grid step processes a chunk of T timesteps, hidden state carried
# across chunks in VMEM scratch.
# ----------------------------------------------------------------------------
def encoder_gru_chunk_kernel(x_ref,      # (T, P)   gathered + OOV-masked embeddings
                             h0_ref,     # (1, P)   initial hidden (padded)
                             wih_ref,    # (P, 3P)  gate-packed W_ih^T
                             whh_ref,    # (P, 3P)  gate-packed W_hh^T
                             bi_ref,     # (1, 3P)  folded biases [b_ir+b_hr, b_iz+b_hz, b_in]
                             bhn_ref,    # (1, P)   b_hn (n-gate hidden bias)
                             out_ref,    # (T, P)   per-chunk output block
                             h_scr):     # (1, P)   VMEM hidden-state carry
    P = h_scr.shape[1]
    T = out_ref.shape[0]
    f32 = jnp.float32

    @pl.when(pl.program_id(0) == 0)
    def _():
        h_scr[...] = h0_ref[...]

    # Chunk preamble: input projection for all T timesteps in one well-shaped
    # MXU matmul (b_ih and the r/z hidden biases are already folded into bi).
    gi = jnp.dot(x_ref[...], wih_ref[...], preferred_element_type=f32) + bi_ref[...]  # (T, 3P)

    whh = whh_ref[...]
    bhn = bhn_ref[...]
    h = h_scr[...]                                   # (1, P)

    rows = []
    for tt in range(T):                              # fully unrolled, static slices
        gh = jnp.dot(h, whh, preferred_element_type=f32)          # (1, 3P)
        gi_t = gi[tt:tt + 1, :]                                    # (1, 3P)

        # Each gate lives in its own 128-lane block -> vreg-aligned slices.
        r = jax.nn.sigmoid(gi_t[:, 0:P] + gh[:, 0:P])
        z = jax.nn.sigmoid(gi_t[:, P:2 * P] + gh[:, P:2 * P])
        n = jnp.tanh(gi_t[:, 2 * P:3 * P] + r * (gh[:, 2 * P:3 * P] + bhn))
        h = (1.0 - z) * n + z * h
        rows.append(h)

    # One aligned (T, P) unmasked store per chunk; padded lanes of h stay 0
    # (pad cols of W / biases / h0 are all zero -> n pad = 0, z pad = 0.5).
    out_ref[...] = jnp.concatenate(rows, axis=0)
    h_scr[...] = h                                   # carry to next chunk


# ----------------------------------------------------------------------------
# One-time parameter preparation (transpose / gate-pack / lane-pad / bias fold)
# ----------------------------------------------------------------------------
def prepare_params(embedding, w_ih, w_hh, b_ih, b_hh):
    """Convert PyTorch nn.Embedding / nn.GRU params to the kernel layout once."""
    H = w_ih.shape[1]
    P = ((H + LANE - 1) // LANE) * LANE          # lane-padded hidden width

    def pack_w(w):
        # w: (3H, H) stacked [W_r; W_z; W_n] (PyTorch layout) -> (P, 3P) transposed.
        w_p = jnp.zeros((P, 3 * P), jnp.float32)
        for g in range(3):
            w_p = w_p.at[:H, g * P:g * P + H].set(
                w[g * H:(g + 1) * H, :].T.astype(jnp.float32))
        return w_p

    b_ih = b_ih.astype(jnp.float32)
    b_hh = b_hh.astype(jnp.float32)

    # Folded biases: r/z hidden biases merge into the input-path bias so only
    # the n-gate hidden bias remains on the per-timestep critical path.
    b_i = jnp.zeros((1, 3 * P), jnp.float32)
    b_i = b_i.at[:, 0:H].set((b_ih[0:H] + b_hh[0:H])[None, :])
    b_i = b_i.at[:, P:P + H].set((b_ih[H:2 * H] + b_hh[H:2 * H])[None, :])
    b_i = b_i.at[:, 2 * P:2 * P + H].set(b_ih[2 * H:3 * H][None, :])
    b_hn = jnp.zeros((1, P), jnp.float32).at[:, :H].set(b_hh[2 * H:3 * H][None, :])

    return {
        "hidden_size": H,
        "padded": P,
        "vocab_size": int(embedding.shape[0]),
        "embedding_p": jnp.pad(embedding.astype(jnp.float32),
                               ((0, 0), (0, P - H))),   # pre-gathered in wrapper
        "w_ih_p": pack_w(w_ih), "w_hh_p": pack_w(w_hh),
        "b_i_p": b_i, "b_hn_p": b_hn,
    }


# ----------------------------------------------------------------------------
# Wrappers
# ----------------------------------------------------------------------------
def encoder_rnn_sequence(tokens, hidden0, p, chunk=DEFAULT_CHUNK):
    """Run the encoder over a whole token sequence in one pallas_call.

    tokens: (seq,) int32 (OOV_INDEX = -1 allowed); hidden0: (1,1,H) f32.
    Returns (outputs (seq,1,H), hidden (1,1,H)) == repeated EncoderRNN.forward.
    """
    H, P, vocab = p["hidden_size"], p["padded"], p["vocab_size"]
    seq_len = int(tokens.shape[0])
    tokens = tokens.reshape(seq_len).astype(jnp.int32)

    # Chunk size: multiple of 8, or the full (short) sequence length.
    T = seq_len if seq_len < chunk else chunk
    n_chunks = -(-seq_len // T)
    seq_pad = n_chunks * T

    # One-time pre-gather of embedding rows with OOV(-1) -> zero vector
    # (indexing work done once, outside the serial recurrence).
    safe = jnp.clip(tokens, 0, vocab - 1)
    x = jnp.take(p["embedding_p"], safe, axis=0)                       # (seq, P)
    x = x * (tokens != OOV_INDEX).astype(jnp.float32)[:, None]
    x = jnp.pad(x, ((0, seq_pad - seq_len), (0, 0)))                   # (seq_pad, P)

    h0 = jnp.pad(hidden0.reshape(1, H).astype(jnp.float32), ((0, 0), (0, P - H)))

    const = lambda c: (0, 0)          # resident weights/biases, DMA'd once

    grid_spec = pltpu.PrefetchScalarGridSpec(
        num_scalar_prefetch=0,
        grid=(n_chunks,),
        in_specs=[
            pl.BlockSpec((T, P), lambda c: (c, 0)),       # embeddings for this chunk
            pl.BlockSpec((1, P), const),                  # initial hidden (full array)
            pl.BlockSpec((P, 3 * P), const),              # W_ih^T (gate-packed)
            pl.BlockSpec((P, 3 * P), const),              # W_hh^T (gate-packed)
            pl.BlockSpec((1, 3 * P), const),              # folded biases
            pl.BlockSpec((1, P), const),                  # b_hn
        ],
        out_specs=pl.BlockSpec((T, P), lambda c: (c, 0)),
        scratch_shapes=[pltpu.VMEM((1, P), jnp.float32)],
    )

    outputs_p = pl.pallas_call(
        encoder_gru_chunk_kernel,
        out_shape=jax.ShapeDtypeStruct((seq_pad, P), jnp.float32),
        grid_spec=grid_spec,
        compiler_params=pltpu.CompilerParams(
            dimension_semantics=("arbitrary",)),   # hidden carried across chunks
    )(x, h0, p["w_ih_p"], p["w_hh_p"], p["b_i_p"], p["b_hn_p"])

    outputs = outputs_p[:seq_len, :H]
    out = outputs.reshape(seq_len, 1, H)
    hidden = outputs[seq_len - 1].reshape(1, 1, H)
    return out, hidden


def encoder_rnn_forward(token, hidden, p):
    """Single EncoderRNN.forward step: token (1,) int32, hidden (1,1,H)."""
    out, hid = encoder_rnn_sequence(token.reshape(1), hidden, p)
    return out.reshape(1, 1, -1), hid


# ----------------------------------------------------------------------------
# Pure-JAX reference (matches PyTorch EncoderRNN.forward applied per token)
# ----------------------------------------------------------------------------
def encoder_rnn_reference(tokens, hidden0, raw):
    H = raw["hidden_size"]
    emb = raw["embedding"]
    w_ih, w_hh = raw["w_ih"], raw["w_hh"]
    b_ih, b_hh = raw["b_ih"], raw["b_hh"]
    vocab = emb.shape[0]

    h = hidden0.reshape(H).astype(jnp.float32)
    outs = []
    for i in range(int(tokens.shape[0])):
        tok = tokens[i]
        x = jnp.where(tok == OOV_INDEX,
                      jnp.zeros((H,), jnp.float32),
                      emb[jnp.clip(tok, 0, vocab - 1)])
        gi = w_ih @ x + b_ih
        gh = w_hh @ h + b_hh
        i_r, i_z, i_n = jnp.split(gi, 3)
        h_r, h_z, h_n = jnp.split(gh, 3)
        r = jax.nn.sigmoid(i_r + h_r)
        z = jax.nn.sigmoid(i_z + h_z)
        n = jnp.tanh(i_n + r * h_n)
        h = (1.0 - z) * n + z * h
        outs.append(h)
    out = jnp.stack(outs).reshape(int(tokens.shape[0]), 1, H)
    return out, h.reshape(1, 1, H)


# ----------------------------------------------------------------------------
if __name__ == "__main__":
    # TODO(synk): saveState/loadState (torch checkpoint I/O) and CUDA placement
    # from the original module have no Pallas equivalent and are omitted.
    vocab_size = 50
    hidden_size = 32
    seq_len = 8

    key = jax.random.PRNGKey(0)
    k_emb, k_wih, k_whh, k_bih, k_bhh, k_h, k_tok = jax.random.split(key, 7)
    bound = hidden_size ** -0.5

    raw = {
        "hidden_size": hidden_size,
        "embedding": jax.random.normal(k_emb, (vocab_size, hidden_size), jnp.float32),
        "w_ih": jax.random.uniform(k_wih, (3 * hidden_size, hidden_size),
                                   jnp.float32, -bound, bound),
        "w_hh": jax.random.uniform(k_whh, (3 * hidden_size, hidden_size),
                                   jnp.float32, -bound, bound),
        "b_ih": jax.random.uniform(k_bih, (3 * hidden_size,),
                                   jnp.float32, -bound, bound),
        "b_hh": jax.random.uniform(k_bhh, (3 * hidden_size,),
                                   jnp.float32, -bound, bound),
    }
    prepared = prepare_params(raw["embedding"], raw["w_ih"], raw["w_hh"],
                              raw["b_ih"], raw["b_hh"])

    hidden0 = jax.random.normal(k_h, (1, 1, hidden_size), jnp.float32)  # initHidden analog

    ok = True

    # --- full-chunk sequence with a couple of OOV (-1) sentinels mixed in ---
    tokens = jax.random.randint(k_tok, (seq_len,), 0, vocab_size, jnp.int32)
    tokens = tokens.at[2].set(OOV_INDEX).at[5].set(OOV_INDEX)

    out_k, hid_k = encoder_rnn_sequence(tokens, hidden0, prepared)
    out_k = jax.block_until_ready(out_k)
    hid_k = jax.block_until_ready(hid_k)
    out_r, hid_r = encoder_rnn_reference(tokens, hidden0, raw)
    ok &= bool(jnp.allclose(out_k, out_r, atol=1e-5, rtol=1e-5))
    ok &= bool(jnp.allclose(hid_k, hid_r, atol=1e-5, rtol=1e-5))

    # --- ragged length (exercises time-chunk padding: 11 tokens, chunk=8) ---
    tokens2 = jnp.concatenate([tokens, jnp.array([1, OOV_INDEX, 3], jnp.int32)])
    out_k2, hid_k2 = encoder_rnn_sequence(tokens2, hidden0, prepared)
    out_k2 = jax.block_until_ready(out_k2)
    hid_k2 = jax.block_until_ready(hid_k2)
    out_r2, hid_r2 = encoder_rnn_reference(tokens2, hidden0, raw)
    ok &= bool(jnp.allclose(out_k2, out_r2, atol=1e-5, rtol=1e-5))
    ok &= bool(jnp.allclose(hid_k2, hid_r2, atol=1e-5, rtol=1e-5))

    # --- single-step path (one EncoderRNN.forward call), incl. OOV ---
    for tok in (jnp.array([7], jnp.int32), jnp.array([OOV_INDEX], jnp.int32)):
        o_k, h_k = encoder_rnn_forward(tok, hidden0, prepared)
        o_k = jax.block_until_ready(o_k)
        h_k = jax.block_until_ready(h_k)
        o_r, h_r = encoder_rnn_reference(tok, hidden0, raw)
        ok &= bool(jnp.allclose(o_k, o_r, atol=1e-5, rtol=1e-5))
        ok &= bool(jnp.allclose(h_k, h_r, atol=1e-5, rtol=1e-5))

    print("KERNEL_OK" if ok else "KERNEL_MISMATCH")
</pallas_src>

<mosaic_0001>
module attributes {stable_mosaic.version = 11 : i64} {
  func.func @encoder_gru_chunk_kernel(%arg0: i32, %arg1: memref<8x128xf32, #tpu.memory_space<vmem>>, %arg2: memref<1x128xf32, #tpu.memory_space<vmem>>, %arg3: memref<128x384xf32, #tpu.memory_space<vmem>>, %arg4: memref<128x384xf32, #tpu.memory_space<vmem>>, %arg5: memref<1x384xf32, #tpu.memory_space<vmem>>, %arg6: memref<1x128xf32, #tpu.memory_space<vmem>>, %arg7: memref<8x128xf32, #tpu.memory_space<vmem>>, %arg8: memref<1x128xf32, #tpu.memory_space<vmem>>) attributes {dimension_semantics = [#tpu.dimension_semantics<arbitrary>], iteration_bounds = array<i64: 1>, scalar_prefetch = 0 : i64, scratch_operands = 1 : i64, tpu.core_type = #tpu.core_type<tc>, window_params = [{transform_indices = @transform_0, window_bounds = array<i64: 8, 128>}, {pipeline_mode = #tpu.pipeline_mode<synchronous>, transform_indices = @transform_1, window_bounds = array<i64: 1, 128>}, {pipeline_mode = #tpu.pipeline_mode<synchronous>, transform_indices = @transform_2, window_bounds = array<i64: 128, 384>}, {pipeline_mode = #tpu.pipeline_mode<synchronous>, transform_indices = @transform_3, window_bounds = array<i64: 128, 384>}, {pipeline_mode = #tpu.pipeline_mode<synchronous>, transform_indices = @transform_4, window_bounds = array<i64: 1, 384>}, {pipeline_mode = #tpu.pipeline_mode<synchronous>, transform_indices = @transform_5, window_bounds = array<i64: 1, 128>}, {transform_indices = @transform_6, window_bounds = array<i64: 8, 128>}]} {
    %c0_i32 = arith.constant 0 : i32
    %0 = arith.cmpi eq, %arg0, %c0_i32 : i32
    %1 = arith.extui %0 : i1 to i32
    %c0_i32_0 = arith.constant 0 : i32
    %2 = arith.cmpi ne, %1, %c0_i32_0 : i32
    scf.if %2 {
      %c0_48 = arith.constant 0 : index
      %c0_49 = arith.constant 0 : index
      %247 = vector.load %arg2[%c0_48, %c0_49] : memref<1x128xf32, #tpu.memory_space<vmem>>, vector<1x128xf32>
      %c0_50 = arith.constant 0 : index
      %c0_51 = arith.constant 0 : index
      %248 = vector.load %arg8[%c0_50, %c0_51] : memref<1x128xf32, #tpu.memory_space<vmem>>, vector<1x128xf32>
      tpu.vector_store %arg8[%c0_50, %c0_51], %247 {strides = array<i32>} : memref<1x128xf32, #tpu.memory_space<vmem>>, vector<1x128xf32>,
    } else {
    }
    %c0 = arith.constant 0 : index
    %c0_1 = arith.constant 0 : index
    %3 = vector.load %arg1[%c0, %c0_1] : memref<8x128xf32, #tpu.memory_space<vmem>>, vector<8x128xf32>
    %c0_2 = arith.constant 0 : index
    %c0_3 = arith.constant 0 : index
    %4 = vector.load %arg3[%c0_2, %c0_3] : memref<128x384xf32, #tpu.memory_space<vmem>>, vector<128x384xf32>
    %cst = arith.constant dense<0.000000e+00> : vector<8x384xf32>
    %5 = tpu.matmul %3, %4, %cst {dimension_numbers = #tpu.dot_dimension_numbers<[1], [0], [0], [1], [0, 0, 1, 1], [], []>} : vector<8x128xf32>, vector<128x384xf32>, vector<8x384xf32> -> vector<8x384xf32>
    %c0_4 = arith.constant 0 : index
    %c0_5 = arith.constant 0 : index
    %6 = vector.load %arg5[%c0_4, %c0_5] : memref<1x384xf32, #tpu.memory_space<vmem>>, vector<1x384xf32>
    %7 = vector.broadcast %6 : vector<1x384xf32> to vector<8x384xf32>
    %8 = arith.addf %5, %7 : vector<8x384xf32>
    %c0_6 = arith.constant 0 : index
    %c0_7 = arith.constant 0 : index
    %9 = vector.load %arg4[%c0_6, %c0_7] : memref<128x384xf32, #tpu.memory_space<vmem>>, vector<128x384xf32>
    %c0_8 = arith.constant 0 : index
    %c0_9 = arith.constant 0 : index
    %10 = vector.load %arg6[%c0_8, %c0_9] : memref<1x128xf32, #tpu.memory_space<vmem>>, vector<1x128xf32>
    %c0_10 = arith.constant 0 : index
    %c0_11 = arith.constant 0 : index
    %11 = vector.load %arg8[%c0_10, %c0_11] : memref<1x128xf32, #tpu.memory_space<vmem>>, vector<1x128xf32>
    %cst_12 = arith.constant dense<0.000000e+00> : vector<1x384xf32>
    %12 = tpu.matmul %11, %9, %cst_12 {dimension_numbers = #tpu.dot_dimension_numbers<[1], [0], [0], [1], [0, 0, 1, 1], [], []>} : vector<1x128xf32>, vector<128x384xf32>, vector<1x384xf32> -> vector<1x384xf32>
    %13 = vector.extract_strided_slice %8 {offsets = [0, 0], sizes = [1, 384], strides = [1, 1]} : vector<8x384xf32> to vector<1x384xf32>
    %14 = vector.extract_strided_slice %13 {offsets = [0, 0], sizes = [1, 128], strides = [1, 1]} : vector<1x384xf32> to vector<1x128xf32>
    %15 = vector.extract_strided_slice %12 {offsets = [0, 0], sizes = [1, 128], strides = [1, 1]} : vector<1x384xf32> to vector<1x128xf32>
    %16 = arith.addf %14, %15 : vector<1x128xf32>
    %17 = arith.negf %16 : vector<1x128xf32>
    %18 = math.exp %17 : vector<1x128xf32>
    %cst_13 = arith.constant 1.000000e+00 : f32
    %19 = vector.broadcast %cst_13 : f32 to vector<1x128xf32>
    %20 = arith.addf %19, %18 : vector<1x128xf32>
    %21 = arith.divf %19, %20 : vector<1x128xf32>
    %22 = vector.extract_strided_slice %13 {offsets = [0, 128], sizes = [1, 128], strides = [1, 1]} : vector<1x384xf32> to vector<1x128xf32>
    %23 = vector.extract_strided_slice %12 {offsets = [0, 128], sizes = [1, 128], strides = [1, 1]} : vector<1x384xf32> to vector<1x128xf32>
    %24 = arith.addf %22, %23 : vector<1x128xf32>
    %25 = arith.negf %24 : vector<1x128xf32>
    %26 = math.exp %25 : vector<1x128xf32>
    %cst_14 = arith.constant 1.000000e+00 : f32
    %27 = vector.broadcast %cst_14 : f32 to vector<1x128xf32>
    %28 = arith.addf %27, %26 : vector<1x128xf32>
    %29 = arith.divf %27, %28 : vector<1x128xf32>
    %30 = vector.extract_strided_slice %13 {offsets = [0, 256], sizes = [1, 128], strides = [1, 1]} : vector<1x384xf32> to vector<1x128xf32>
    %31 = vector.extract_strided_slice %12 {offsets = [0, 256], sizes = [1, 128], strides = [1, 1]} : vector<1x384xf32> to vector<1x128xf32>
    %32 = arith.addf %31, %10 : vector<1x128xf32>
    %33 = arith.mulf %21, %32 : vector<1x128xf32>
    %34 = arith.addf %30, %33 : vector<1x128xf32>
    %35 = math.tanh %34 : vector<1x128xf32>
    %cst_15 = arith.constant 1.000000e+00 : f32
    %36 = vector.broadcast %cst_15 : f32 to vector<1x128xf32>
    %37 = arith.subf %36, %29 : vector<1x128xf32>
    %38 = arith.mulf %37, %35 : vector<1x128xf32>
    %39 = arith.mulf %29, %11 : vector<1x128xf32>
    %40 = arith.addf %38, %39 : vector<1x128xf32>
    %cst_16 = arith.constant dense<0.000000e+00> : vector<1x384xf32>
    %41 = tpu.matmul %40, %9, %cst_16 {dimension_numbers = #tpu.dot_dimension_numbers<[1], [0], [0], [1], [0, 0, 1, 1], [], []>} : vector<1x128xf32>, vector<128x384xf32>, vector<1x384xf32> -> vector<1x384xf32>
    %42 = vector.extract_strided_slice %8 {offsets = [1, 0], sizes = [1, 384], strides = [1, 1]} : vector<8x384xf32> to vector<1x384xf32>
    %43 = vector.extract_strided_slice %42 {offsets = [0, 0], sizes = [1, 128], strides = [1, 1]} : vector<1x384xf32> to vector<1x128xf32>
    %44 = vector.extract_strided_slice %41 {offsets = [0, 0], sizes = [1, 128], strides = [1, 1]} : vector<1x384xf32> to vector<1x128xf32>
    %45 = arith.addf %43, %44 : vector<1x128xf32>
    %46 = arith.negf %45 : vector<1x128xf32>
    %47 = math.exp %46 : vector<1x128xf32>
    %cst_17 = arith.constant 1.000000e+00 : f32
    %48 = vector.broadcast %cst_17 : f32 to vector<1x128xf32>
    %49 = arith.addf %48, %47 : vector<1x128xf32>
    %50 = arith.divf %48, %49 : vector<1x128xf32>
    %51 = vector.extract_strided_slice %42 {offsets = [0, 128], sizes = [1, 128], strides = [1, 1]} : vector<1x384xf32> to vector<1x128xf32>
    %52 = vector.extract_strided_slice %41 {offsets = [0, 128], sizes = [1, 128], strides = [1, 1]} : vector<1x384xf32> to vector<1x128xf32>
    %53 = arith.addf %51, %52 : vector<1x128xf32>
    %54 = arith.negf %53 : vector<1x128xf32>
    %55 = math.exp %54 : vector<1x128xf32>
    %cst_18 = arith.constant 1.000000e+00 : f32
    %56 = vector.broadcast %cst_18 : f32 to vector<1x128xf32>
    %57 = arith.addf %56, %55 : vector<1x128xf32>
    %58 = arith.divf %56, %57 : vector<1x128xf32>
    %59 = vector.extract_strided_slice %42 {offsets = [0, 256], sizes = [1, 128], strides = [1, 1]} : vector<1x384xf32> to vector<1x128xf32>
    %60 = vector.extract_strided_slice %41 {offsets = [0, 256], sizes = [1, 128], strides = [1, 1]} : vector<1x384xf32> to vector<1x128xf32>
    %61 = arith.addf %60, %10 : vector<1x128xf32>
    %62 = arith.mulf %50, %61 : vector<1x128xf32>
    %63 = arith.addf %59, %62 : vector<1x128xf32>
    %64 = math.tanh %63 : vector<1x128xf32>
    %cst_19 = arith.constant 1.000000e+00 : f32
    %65 = vector.broadcast %cst_19 : f32 to vector<1x128xf32>
    %66 = arith.subf %65, %58 : vector<1x128xf32>
    %67 = arith.mulf %66, %64 : vector<1x128xf32>
    %68 = arith.mulf %58, %40 : vector<1x128xf32>
    %69 = arith.addf %67, %68 : vector<1x128xf32>
    %cst_20 = arith.constant dense<0.000000e+00> : vector<1x384xf32>
    %70 = tpu.matmul %69, %9, %cst_20 {dimension_numbers = #tpu.dot_dimension_numbers<[1], [0], [0], [1], [0, 0, 1, 1], [], []>} : vector<1x128xf32>, vector<128x384xf32>, vector<1x384xf32> -> vector<1x384xf32>
    %71 = vector.extract_strided_slice %8 {offsets = [2, 0], sizes = [1, 384], strides = [1, 1]} : vector<8x384xf32> to vector<1x384xf32>
    %72 = vector.extract_strided_slice %71 {offsets = [0, 0], sizes = [1, 128], strides = [1, 1]} : vector<1x384xf32> to vector<1x128xf32>
    %73 = vector.extract_strided_slice %70 {offsets = [0, 0], sizes = [1, 128], strides = [1, 1]} : vector<1x384xf32> to vector<1x128xf32>
    %74 = arith.addf %72, %73 : vector<1x128xf32>
    %75 = arith.negf %74 : vector<1x128xf32>
    %76 = math.exp %75 : vector<1x128xf32>
    %cst_21 = arith.constant 1.000000e+00 : f32
    %77 = vector.broadcast %cst_21 : f32 to vector<1x128xf32>
    %78 = arith.addf %77, %76 : vector<1x128xf32>
    %79 = arith.divf %77, %78 : vector<1x128xf32>
    %80 = vector.extract_strided_slice %71 {offsets = [0, 128], sizes = [1, 128], strides = [1, 1]} : vector<1x384xf32> to vector<1x128xf32>
    %81 = vector.extract_strided_slice %70 {offsets = [0, 128], sizes = [1, 128], strides = [1, 1]} : vector<1x384xf32> to vector<1x128xf32>
    %82 = arith.addf %80, %81 : vector<1x128xf32>
    %83 = arith.negf %82 : vector<1x128xf32>
    %84 = math.exp %83 : vector<1x128xf32>
    %cst_22 = arith.constant 1.000000e+00 : f32
    %85 = vector.broadcast %cst_22 : f32 to vector<1x128xf32>
    %86 = arith.addf %85, %84 : vector<1x128xf32>
    %87 = arith.divf %85, %86 : vector<1x128xf32>
    %88 = vector.extract_strided_slice %71 {offsets = [0, 256], sizes = [1, 128], strides = [1, 1]} : vector<1x384xf32> to vector<1x128xf32>
    %89 = vector.extract_strided_slice %70 {offsets = [0, 256], sizes = [1, 128], strides = [1, 1]} : vector<1x384xf32> to vector<1x128xf32>
    %90 = arith.addf %89, %10 : vector<1x128xf32>
    %91 = arith.mulf %79, %90 : vector<1x128xf32>
    %92 = arith.addf %88, %91 : vector<1x128xf32>
    %93 = math.tanh %92 : vector<1x128xf32>
    %cst_23 = arith.constant 1.000000e+00 : f32
    %94 = vector.broadcast %cst_23 : f32 to vector<1x128xf32>
    %95 = arith.subf %94, %87 : vector<1x128xf32>
    %96 = arith.mulf %95, %93 : vector<1x128xf32>
    %97 = arith.mulf %87, %69 : vector<1x128xf32>
    %98 = arith.addf %96, %97 : vector<1x128xf32>
    %cst_24 = arith.constant dense<0.000000e+00> : vector<1x384xf32>
    %99 = tpu.matmul %98, %9, %cst_24 {dimension_numbers = #tpu.dot_dimension_numbers<[1], [0], [0], [1], [0, 0, 1, 1], [], []>} : vector<1x128xf32>, vector<128x384xf32>, vector<1x384xf32> -> vector<1x384xf32>
    %100 = vector.extract_strided_slice %8 {offsets = [3, 0], sizes = [1, 384], strides = [1, 1]} : vector<8x384xf32> to vector<1x384xf32>
    %101 = vector.extract_strided_slice %100 {offsets = [0, 0], sizes = [1, 128], strides = [1, 1]} : vector<1x384xf32> to vector<1x128xf32>
    %102 = vector.extract_strided_slice %99 {offsets = [0, 0], sizes = [1, 128], strides = [1, 1]} : vector<1x384xf32> to vector<1x128xf32>
    %103 = arith.addf %101, %102 : vector<1x128xf32>
    %104 = arith.negf %103 : vector<1x128xf32>
    %105 = math.exp %104 : vector<1x128xf32>
    %cst_25 = arith.constant 1.000000e+00 : f32
    %106 = vector.broadcast %cst_25 : f32 to vector<1x128xf32>
    %107 = arith.addf %106, %105 : vector<1x128xf32>
    %108 = arith.divf %106, %107 : vector<1x128xf32>
    %109 = vector.extract_strided_slice %100 {offsets = [0, 128], sizes = [1, 128], strides = [1, 1]} : vector<1x384xf32> to vector<1x128xf32>
    %110 = vector.extract_strided_slice %99 {offsets = [0, 128], sizes = [1, 128], strides = [1, 1]} : vector<1x384xf32> to vector<1x128xf32>
    %111 = arith.addf %109, %110 : vector<1x128xf32>
    %112 = arith.negf %111 : vector<1x128xf32>
    %113 = math.exp %112 : vector<1x128xf32>
    %cst_26 = arith.constant 1.000000e+00 : f32
    %114 = vector.broadcast %cst_26 : f32 to vector<1x128xf32>
    %115 = arith.addf %114, %113 : vector<1x128xf32>
    %116 = arith.divf %114, %115 : vector<1x128xf32>
    %117 = vector.extract_strided_slice %100 {offsets = [0, 256], sizes = [1, 128], strides = [1, 1]} : vector<1x384xf32> to vector<1x128xf32>
    %118 = vector.extract_strided_slice %99 {offsets = [0, 256], sizes = [1, 128], strides = [1, 1]} : vector<1x384xf32> to vector<1x128xf32>
    %119 = arith.addf %118, %10 : vector<1x128xf32>
    %120 = arith.mulf %108, %119 : vector<1x128xf32>
    %121 = arith.addf %117, %120 : vector<1x128xf32>
    %122 = math.tanh %121 : vector<1x128xf32>
    %cst_27 = arith.constant 1.000000e+00 : f32
    %123 = vector.broadcast %cst_27 : f32 to vector<1x128xf32>
    %124 = arith.subf %123, %116 : vector<1x128xf32>
    %125 = arith.mulf %124, %122 : vector<1x128xf32>
    %126 = arith.mulf %116, %98 : vector<1x128xf32>
    %127 = arith.addf %125, %126 : vector<1x128xf32>
    %cst_28 = arith.constant dense<0.000000e+00> : vector<1x384xf32>
    %128 = tpu.matmul %127, %9, %cst_28 {dimension_numbers = #tpu.dot_dimension_numbers<[1], [0], [0], [1], [0, 0, 1, 1], [], []>} : vector<1x128xf32>, vector<128x384xf32>, vector<1x384xf32> -> vector<1x384xf32>
    %129 = vector.extract_strided_slice %8 {offsets = [4, 0], sizes = [1, 384], strides = [1, 1]} : vector<8x384xf32> to vector<1x384xf32>
    %130 = vector.extract_strided_slice %129 {offsets = [0, 0], sizes = [1, 128], strides = [1, 1]} : vector<1x384xf32> to vector<1x128xf32>
    %131 = vector.extract_strided_slice %128 {offsets = [0, 0], sizes = [1, 128], strides = [1, 1]} : vector<1x384xf32> to vector<1x128xf32>
    %132 = arith.addf %130, %131 : vector<1x128xf32>
    %133 = arith.negf %132 : vector<1x128xf32>
    %134 = math.exp %133 : vector<1x128xf32>
    %cst_29 = arith.constant 1.000000e+00 : f32
    %135 = vector.broadcast %cst_29 : f32 to vector<1x128xf32>
    %136 = arith.addf %135, %134 : vector<1x128xf32>
    %137 = arith.divf %135, %136 : vector<1x128xf32>
    %138 = vector.extract_strided_slice %129 {offsets = [0, 128], sizes = [1, 128], strides = [1, 1]} : vector<1x384xf32> to vector<1x128xf32>
    %139 = vector.extract_strided_slice %128 {offsets = [0, 128], sizes = [1, 128], strides = [1, 1]} : vector<1x384xf32> to vector<1x128xf32>
    %140 = arith.addf %138, %139 : vector<1x128xf32>
    %141 = arith.negf %140 : vector<1x128xf32>
    %142 = math.exp %141 : vector<1x128xf32>
    %cst_30 = arith.constant 1.000000e+00 : f32
    %143 = vector.broadcast %cst_30 : f32 to vector<1x128xf32>
    %144 = arith.addf %143, %142 : vector<1x128xf32>
    %145 = arith.divf %143, %144 : vector<1x128xf32>
    %146 = vector.extract_strided_slice %129 {offsets = [0, 256], sizes = [1, 128], strides = [1, 1]} : vector<1x384xf32> to vector<1x128xf32>
    %147 = vector.extract_strided_slice %128 {offsets = [0, 256], sizes = [1, 128], strides = [1, 1]} : vector<1x384xf32> to vector<1x128xf32>
    %148 = arith.addf %147, %10 : vector<1x128xf32>
    %149 = arith.mulf %137, %148 : vector<1x128xf32>
    %150 = arith.addf %146, %149 : vector<1x128xf32>
    %151 = math.tanh %150 : vector<1x128xf32>
    %cst_31 = arith.constant 1.000000e+00 : f32
    %152 = vector.broadcast %cst_31 : f32 to vector<1x128xf32>
    %153 = arith.subf %152, %145 : vector<1x128xf32>
    %154 = arith.mulf %153, %151 : vector<1x128xf32>
    %155 = arith.mulf %145, %127 : vector<1x128xf32>
    %156 = arith.addf %154, %155 : vector<1x128xf32>
    %cst_32 = arith.constant dense<0.000000e+00> : vector<1x384xf32>
    %157 = tpu.matmul %156, %9, %cst_32 {dimension_numbers = #tpu.dot_dimension_numbers<[1], [0], [0], [1], [0, 0, 1, 1], [], []>} : vector<1x128xf32>, vector<128x384xf32>, vector<1x384xf32> -> vector<1x384xf32>
    %158 = vector.extract_strided_slice %8 {offsets = [5, 0], sizes = [1, 384], strides = [1, 1]} : vector<8x384xf32> to vector<1x384xf32>
    %159 = vector.extract_strided_slice %158 {offsets = [0, 0], sizes = [1, 128], strides = [1, 1]} : vector<1x384xf32> to vector<1x128xf32>
    %160 = vector.extract_strided_slice %157 {offsets = [0, 0], sizes = [1, 128], strides = [1, 1]} : vector<1x384xf32> to vector<1x128xf32>
    %161 = arith.addf %159, %160 : vector<1x128xf32>
    %162 = arith.negf %161 : vector<1x128xf32>
    %163 = math.exp %162 : vector<1x128xf32>
    %cst_33 = arith.constant 1.000000e+00 : f32
    %164 = vector.broadcast %cst_33 : f32 to vector<1x128xf32>
    %165 = arith.addf %164, %163 : vector<1x128xf32>
    %166 = arith.divf %164, %165 : vector<1x128xf32>
    %167 = vector.extract_strided_slice %158 {offsets = [0, 128], sizes = [1, 128], strides = [1, 1]} : vector<1x384xf32> to vector<1x128xf32>
    %168 = vector.extract_strided_slice %157 {offsets = [0, 128], sizes = [1, 128], strides = [1, 1]} : vector<1x384xf32> to vector<1x128xf32>
    %169 = arith.addf %167, %168 : vector<1x128xf32>
    %170 = arith.negf %169 : vector<1x128xf32>
    %171 = math.exp %170 : vector<1x128xf32>
    %cst_34 = arith.constant 1.000000e+00 : f32
    %172 = vector.broadcast %cst_34 : f32 to vector<1x128xf32>
    %173 = arith.addf %172, %171 : vector<1x128xf32>
    %174 = arith.divf %172, %173 : vector<1x128xf32>
    %175 = vector.extract_strided_slice %158 {offsets = [0, 256], sizes = [1, 128], strides = [1, 1]} : vector<1x384xf32> to vector<1x128xf32>
    %176 = vector.extract_strided_slice %157 {offsets = [0, 256], sizes = [1, 128], strides = [1, 1]} : vector<1x384xf32> to vector<1x128xf32>
    %177 = arith.addf %176, %10 : vector<1x128xf32>
    %178 = arith.mulf %166, %177 : vector<1x128xf32>
    %179 = arith.addf %175, %178 : vector<1x128xf32>
    %180 = math.tanh %179 : vector<1x128xf32>
    %cst_35 = arith.constant 1.000000e+00 : f32
    %181 = vector.broadcast %cst_35 : f32 to vector<1x128xf32>
    %182 = arith.subf %181, %174 : vector<1x128xf32>
    %183 = arith.mulf %182, %180 : vector<1x128xf32>
    %184 = arith.mulf %174, %156 : vector<1x128xf32>
    %185 = arith.addf %183, %184 : vector<1x128xf32>
    %cst_36 = arith.constant dense<0.000000e+00> : vector<1x384xf32>
    %186 = tpu.matmul %185, %9, %cst_36 {dimension_numbers = #tpu.dot_dimension_numbers<[1], [0], [0], [1], [0, 0, 1, 1], [], []>} : vector<1x128xf32>, vector<128x384xf32>, vector<1x384xf32> -> vector<1x384xf32>
    %187 = vector.extract_strided_slice %8 {offsets = [6, 0], sizes = [1, 384], strides = [1, 1]} : vector<8x384xf32> to vector<1x384xf32>
    %188 = vector.extract_strided_slice %187 {offsets = [0, 0], sizes = [1, 128], strides = [1, 1]} : vector<1x384xf32> to vector<1x128xf32>
    %189 = vector.extract_strided_slice %186 {offsets = [0, 0], sizes = [1, 128], strides = [1, 1]} : vector<1x384xf32> to vector<1x128xf32>
    %190 = arith.addf %188, %189 : vector<1x128xf32>
    %191 = arith.negf %190 : vector<1x128xf32>
    %192 = math.exp %191 : vector<1x128xf32>
    %cst_37 = arith.constant 1.000000e+00 : f32
    %193 = vector.broadcast %cst_37 : f32 to vector<1x128xf32>
    %194 = arith.addf %193, %192 : vector<1x128xf32>
    %195 = arith.divf %193, %194 : vector<1x128xf32>
    %196 = vector.extract_strided_slice %187 {offsets = [0, 128], sizes = [1, 128], strides = [1, 1]} : vector<1x384xf32> to vector<1x128xf32>
    %197 = vector.extract_strided_slice %186 {offsets = [0, 128], sizes = [1, 128], strides = [1, 1]} : vector<1x384xf32> to vector<1x128xf32>
    %198 = arith.addf %196, %197 : vector<1x128xf32>
    %199 = arith.negf %198 : vector<1x128xf32>
    %200 = math.exp %199 : vector<1x128xf32>
    %cst_38 = arith.constant 1.000000e+00 : f32
    %201 = vector.broadcast %cst_38 : f32 to vector<1x128xf32>
    %202 = arith.addf %201, %200 : vector<1x128xf32>
    %203 = arith.divf %201, %202 : vector<1x128xf32>
    %204 = vector.extract_strided_slice %187 {offsets = [0, 256], sizes = [1, 128], strides = [1, 1]} : vector<1x384xf32> to vector<1x128xf32>
    %205 = vector.extract_strided_slice %186 {offsets = [0, 256], sizes = [1, 128], strides = [1, 1]} : vector<1x384xf32> to vector<1x128xf32>
    %206 = arith.addf %205, %10 : vector<1x128xf32>
    %207 = arith.mulf %195, %206 : vector<1x128xf32>
    %208 = arith.addf %204, %207 : vector<1x128xf32>
    %209 = math.tanh %208 : vector<1x128xf32>
    %cst_39 = arith.constant 1.000000e+00 : f32
    %210 = vector.broadcast %cst_39 : f32 to vector<1x128xf32>
    %211 = arith.subf %210, %203 : vector<1x128xf32>
    %212 = arith.mulf %211, %209 : vector<1x128xf32>
    %213 = arith.mulf %203, %185 : vector<1x128xf32>
    %214 = arith.addf %212, %213 : vector<1x128xf32>
    %cst_40 = arith.constant dense<0.000000e+00> : vector<1x384xf32>
    %215 = tpu.matmul %214, %9, %cst_40 {dimension_numbers = #tpu.dot_dimension_numbers<[1], [0], [0], [1], [0, 0, 1, 1], [], []>} : vector<1x128xf32>, vector<128x384xf32>, vector<1x384xf32> -> vector<1x384xf32>
    %216 = vector.extract_strided_slice %8 {offsets = [7, 0], sizes = [1, 384], strides = [1, 1]} : vector<8x384xf32> to vector<1x384xf32>
    %217 = vector.extract_strided_slice %216 {offsets = [0, 0], sizes = [1, 128], strides = [1, 1]} : vector<1x384xf32> to vector<1x128xf32>
    %218 = vector.extract_strided_slice %215 {offsets = [0, 0], sizes = [1, 128], strides = [1, 1]} : vector<1x384xf32> to vector<1x128xf32>
    %219 = arith.addf %217, %218 : vector<1x128xf32>
    %220 = arith.negf %219 : vector<1x128xf32>
    %221 = math.exp %220 : vector<1x128xf32>
    %cst_41 = arith.constant 1.000000e+00 : f32
    %222 = vector.broadcast %cst_41 : f32 to vector<1x128xf32>
    %223 = arith.addf %222, %221 : vector<1x128xf32>
    %224 = arith.divf %222, %223 : vector<1x128xf32>
    %225 = vector.extract_strided_slice %216 {offsets = [0, 128], sizes = [1, 128], strides = [1, 1]} : vector<1x384xf32> to vector<1x128xf32>
    %226 = vector.extract_strided_slice %215 {offsets = [0, 128], sizes = [1, 128], strides = [1, 1]} : vector<1x384xf32> to vector<1x128xf32>
    %227 = arith.addf %225, %226 : vector<1x128xf32>
    %228 = arith.negf %227 : vector<1x128xf32>
    %229 = math.exp %228 : vector<1x128xf32>
    %cst_42 = arith.constant 1.000000e+00 : f32
    %230 = vector.broadcast %cst_42 : f32 to vector<1x128xf32>
    %231 = arith.addf %230, %229 : vector<1x128xf32>
    %232 = arith.divf %230, %231 : vector<1x128xf32>
    %233 = vector.extract_strided_slice %216 {offsets = [0, 256], sizes = [1, 128], strides = [1, 1]} : vector<1x384xf32> to vector<1x128xf32>
    %234 = vector.extract_strided_slice %215 {offsets = [0, 256], sizes = [1, 128], strides = [1, 1]} : vector<1x384xf32> to vector<1x128xf32>
    %235 = arith.addf %234, %10 : vector<1x128xf32>
    %236 = arith.mulf %224, %235 : vector<1x128xf32>
    %237 = arith.addf %233, %236 : vector<1x128xf32>
    %238 = math.tanh %237 : vector<1x128xf32>
    %cst_43 = arith.constant 1.000000e+00 : f32
    %239 = vector.broadcast %cst_43 : f32 to vector<1x128xf32>
    %240 = arith.subf %239, %232 : vector<1x128xf32>
    %241 = arith.mulf %240, %238 : vector<1x128xf32>
    %242 = arith.mulf %232, %214 : vector<1x128xf32>
    %243 = arith.addf %241, %242 : vector<1x128xf32>
    %244 = tpu.concatenate %40, %69, %98, %127, %156, %185, %214, %243 in 0 : vector<1x128xf32>, vector<1x128xf32>, vector<1x128xf32>, vector<1x128xf32>, vector<1x128xf32>, vector<1x128xf32>, vector<1x128xf32>, vector<1x128xf32> -> vector<8x128xf32>
    %c0_44 = arith.constant 0 : index
    %c0_45 = arith.constant 0 : index
    %245 = vector.load %arg7[%c0_44, %c0_45] : memref<8x128xf32, #tpu.memory_space<vmem>>, vector<8x128xf32>
    tpu.vector_store %arg7[%c0_44, %c0_45], %244 {strides = array<i32>} : memref<8x128xf32, #tpu.memory_space<vmem>>, vector<8x128xf32>,
    %c0_46 = arith.constant 0 : index
    %c0_47 = arith.constant 0 : index
    %246 = vector.load %arg8[%c0_46, %c0_47] : memref<1x128xf32, #tpu.memory_space<vmem>>, vector<1x128xf32>
    tpu.vector_store %arg8[%c0_46, %c0_47], %243 {strides = array<i32>} : memref<1x128xf32, #tpu.memory_space<vmem>>, vector<1x128xf32>,
    return
  }
  func.func @transform_0(%arg0: i32) -> (i32, i32) {
    %c0_i32 = arith.constant 0 : i32
    %c0_i32_0 = arith.constant 0 : i32
    return %arg0, %c0_i32 : i32, i32
  }
  func.func @transform_1(%arg0: i32) -> (i32, i32) {
    %c0_i32 = arith.constant 0 : i32
    %c0_i32_0 = arith.constant 0 : i32
    %c0_i32_1 = arith.constant 0 : i32
    return %c0_i32, %c0_i32_0 : i32, i32
  }
  func.func @transform_2(%arg0: i32) -> (i32, i32) {
    %c0_i32 = arith.constant 0 : i32
    %c0_i32_0 = arith.constant 0 : i32
    %c0_i32_1 = arith.constant 0 : i32
    return %c0_i32, %c0_i32_0 : i32, i32
  }
  func.func @transform_3(%arg0: i32) -> (i32, i32) {
    %c0_i32 = arith.constant 0 : i32
    %c0_i32_0 = arith.constant 0 : i32
    %c0_i32_1 = arith.constant 0 : i32
    return %c0_i32, %c0_i32_0 : i32, i32
  }
  func.func @transform_4(%arg0: i32) -> (i32, i32) {
    %c0_i32 = arith.constant 0 : i32
    %c0_i32_0 = arith.constant 0 : i32
    %c0_i32_1 = arith.constant 0 : i32
    return %c0_i32, %c0_i32_0 : i32, i32
  }
  func.func @transform_5(%arg0: i32) -> (i32, i32) {
    %c0_i32 = arith.constant 0 : i32
    %c0_i32_0 = arith.constant 0 : i32
    %c0_i32_1 = arith.constant 0 : i32
    return %c0_i32, %c0_i32_0 : i32, i32
  }
  func.func @transform_6(%arg0: i32) -> (i32, i32) {
    %c0_i32 = arith.constant 0 : i32
    %c0_i32_0 = arith.constant 0 : i32
    return %arg0, %c0_i32 : i32, i32
  }
}

</mosaic_0001>

<llo_original>
// kernel: tpu_custom_call.1
$region0: #{tpu_custom_call.1}
  #allocation0 [shape = 'u32[]', space=smem, size = 0x4, offset = 0x4, fixed_abs, tag = 'smem constant byte address 0x4 - core index']
  #allocation1 [shape = 'u32[144,128]{1,0:T(1,128)}', space=vmem, size = 0x12000, scoped, tag = 'internal scratch']
  #allocation2 [shape = 'f32[1,128]{1,0:T(1,128)}', space=vmem, size = 0x200, scoped, tag = 'scratch operand']
  %s0 = inlined_call_operand.hbm [shape: f32[8,128], index: 0, kind: input, shape index: {}]
  %s1 = inlined_call_operand.vmem [shape: f32[1,128], index: 1, kind: input, shape index: {}]
  %s2 = inlined_call_operand.hbm [shape: f32[128,384], index: 2, kind: input, shape index: {}]
  %s3 = inlined_call_operand.hbm [shape: f32[128,384], index: 3, kind: input, shape index: {}]
  %s4 = inlined_call_operand.vmem [shape: f32[1,384], index: 4, kind: input, shape index: {}]
  %s5 = inlined_call_operand.vmem [shape: f32[1,128], index: 5, kind: input, shape index: {}]
  %s6 = inlined_call_operand.hbm [shape: f32[8,128], index: 6, kind: output, shape index: {}]
  %s7 = sld [smem:[#allocation0]]
  $region50: #{tpu_custom_call.1} parent=0
    _
  %s9 = ssub.s32 1, %s7
  %s10 = scalar_select 0, %s9, %s7
  $region1: #{tpu_custom_call.1} parent=0
    #allocation3 [shape = 'u8[4096]{0}', space=vmem, size = 0x1000, scoped, tag = 'input window, operand 0, single buffered']
    #allocation4 [shape = 's32[1]{0}', space=sflag, size = 0x4, scoped, tag = 'scoped memory for tpu_custom_call.1']
    #allocation5 [shape = 's32[1]{0}', space=sflag, size = 0x4, scoped, tag = 'scoped memory for tpu_custom_call.1']
    #allocation6 [shape = 'u8[196608]{0}', space=vmem, size = 0x30000, scoped, tag = 'input window, operand 2, single buffered']
    #allocation7 [shape = 's32[1]{0}', space=sflag, size = 0x4, scoped, tag = 'scoped memory for tpu_custom_call.1']
    #allocation8 [shape = 'u8[196608]{0}', space=vmem, size = 0x30000, scoped, tag = 'input window, operand 3, single buffered']
    #allocation9 [shape = 'u8[4096]{0}', space=vmem, size = 0x1000, scoped, tag = 'output window, operand 0, single buffered']
    %11 = vsyncpa [#allocation4], 0
    %12 = vsyncpa [#allocation7], 0
    %13 = vsyncpa [#allocation5], 0
    // Predicated region
    $region2: #{tpu_custom_call.1} parent=1 // pred_check
      _
    $region3: #{tpu_custom_call.1} parent=1 // pred_check_branch
      %15 = sbr.rel (0) target = $region5
    $region4: #{tpu_custom_call.1} parent=1 // pred_region
      %s17 = ssub.s32 128, 128
      %18 = vsyncadd [#allocation4], %s17
      %s20 = sshll.u32 [#allocation3], 4
      %s21 = int_to_ptr.vmem [resolvable:$true] %s20
      %23 = dma.hbm_to_vmem [thread:$0]  %s0, 128, %s21, [#allocation4]
    $region5: #{tpu_custom_call.1} parent=1 // pred_fallthru
      _
    // Predicated region
    $region6: #{tpu_custom_call.1} parent=1 // pred_check
      _
    $region7: #{tpu_custom_call.1} parent=1 // pred_check_branch
      %25 = sbr.rel (0) target = $region9
    $region8: #{tpu_custom_call.1} parent=1 // pred_region
      _
    $region9: #{tpu_custom_call.1} parent=1 // pred_fallthru
      _
    // Predicated region
    $region10: #{tpu_custom_call.1} parent=1 // pred_check
      _
    $region11: #{tpu_custom_call.1} parent=1 // pred_check_branch
      %27 = sbr.rel (0) target = $region13
    $region12: #{tpu_custom_call.1} parent=1 // pred_region
      %s29 = ssub.s32 6144, 6144
      %30 = vsyncadd [#allocation7], %s29
      %s31 = sshll.u32 [#allocation6], 4
      %s32 = int_to_ptr.vmem [resolvable:$true] %s31
      %37 = dma.hbm_to_vmem [thread:$0]  %s2, 6144, %s32, [#allocation7], 384, 384, 24
    $region13: #{tpu_custom_call.1} parent=1 // pred_fallthru
      _
    // Predicated region
    $region14: #{tpu_custom_call.1} parent=1 // pred_check
      _
    $region15: #{tpu_custom_call.1} parent=1 // pred_check_branch
      %39 = sbr.rel (0) target = $region17
    $region16: #{tpu_custom_call.1} parent=1 // pred_region
      %s41 = ssub.s32 6144, 6144
      %42 = vsyncadd [#allocation7], %s41
      %s43 = sshll.u32 [#allocation8], 4
      %s44 = int_to_ptr.vmem [resolvable:$true] %s43
      %49 = dma.hbm_to_vmem [thread:$0]  %s3, 6144, %s44, [#allocation7], 384, 384, 24
    $region17: #{tpu_custom_call.1} parent=1 // pred_fallthru
      _
    // Predicated region
    $region18: #{tpu_custom_call.1} parent=1 // pred_check
      _
    $region19: #{tpu_custom_call.1} parent=1 // pred_check_branch
      %51 = sbr.rel (0) target = $region21
    $region20: #{tpu_custom_call.1} parent=1 // pred_region
      _
    $region21: #{tpu_custom_call.1} parent=1 // pred_fallthru
      _
    // Predicated region
    $region22: #{tpu_custom_call.1} parent=1 // pred_check
      _
    $region23: #{tpu_custom_call.1} parent=1 // pred_check_branch
      %53 = sbr.rel (0) target = $region25
    $region24: #{tpu_custom_call.1} parent=1 // pred_region
      _
    $region25: #{tpu_custom_call.1} parent=1 // pred_fallthru
      _
    // Predicated region
    $region26: #{tpu_custom_call.1} parent=1 // pred_check
      _
    $region27: #{tpu_custom_call.1} parent=1 // pred_check_branch
      %55 = sbr.rel (0) target = $region29
    $region28: #{tpu_custom_call.1} parent=1 // pred_region
      %56 = dma.done [#allocation4], 128
    $region29: #{tpu_custom_call.1} parent=1 // pred_fallthru
      _
    // Predicated region
    $region30: #{tpu_custom_call.1} parent=1 // pred_check
      _
    $region31: #{tpu_custom_call.1} parent=1 // pred_check_branch
      %58 = sbr.rel (0) target = $region33
    $region32: #{tpu_custom_call.1} parent=1 // pred_region
      %59 = dma.done [#allocation7], 6144
    $region33: #{tpu_custom_call.1} parent=1 // pred_fallthru
      _
    // Predicated region
    $region34: #{tpu_custom_call.1} parent=1 // pred_check
      _
    $region35: #{tpu_custom_call.1} parent=1 // pred_check_branch
      %61 = sbr.rel (0) target = $region37
    $region36: #{tpu_custom_call.1} parent=1 // pred_region
      %62 = dma.done [#allocation7], 6144
    $region37: #{tpu_custom_call.1} parent=1 // pred_fallthru
      _
    %p63 = scmp.eq.s32.totalorder 0, 0
    // Predicated region
    $region38: #{tpu_custom_call.1} parent=1 // pred_check
      %p64 = pneg %p63
    $region39: #{tpu_custom_call.1} parent=1 // pred_check_branch
      %66 = sbr.rel (%p64) target = $region41
    $region40: #{tpu_custom_call.1} parent=1 // pred_region
      %v67 = vld [vmem:[%s1] sm:$0x1]
      %68 = vst [vmem:[#allocation2] sm:$0x1] %v67
    $region41: #{tpu_custom_call.1} parent=1 // pred_fallthru
      _
    %v69 = vld [vmem:[#allocation3] sm:$0xff]
    %v70 = vld [vmem:[#allocation6] sm:$0xff]
    %v71 = vld [vmem:[#allocation6 + $0x8] sm:$0xff]
    %v72 = vld [vmem:[#allocation6 + $0x10] sm:$0xff]
    %v73 = vld [vmem:[#allocation6 + $0x18] sm:$0xff]
    %v74 = vld [vmem:[#allocation6 + $0x20] sm:$0xff]
    %v75 = vld [vmem:[#allocation6 + $0x28] sm:$0xff]
    %v76 = vld [vmem:[#allocation6 + $0x30] sm:$0xff]
    %v77 = vld [vmem:[#allocation6 + $0x38] sm:$0xff]
    %v78 = vld [vmem:[#allocation6 + $0x40] sm:$0xff]
    %v79 = vld [vmem:[#allocation6 + $0x48] sm:$0xff]
    %v80 = vld [vmem:[#allocation6 + $0x50] sm:$0xff]
    %v81 = vld [vmem:[#allocation6 + $0x58] sm:$0xff]
    %v82 = vld [vmem:[#allocation6 + $0x60] sm:$0xff]
    %v83 = vld [vmem:[#allocation6 + $0x68] sm:$0xff]
    %v84 = vld [vmem:[#allocation6 + $0x70] sm:$0xff]
    %v85 = vld [vmem:[#allocation6 + $0x78] sm:$0xff]
    %v86 = vld [vmem:[#allocation6 + $0x80] sm:$0xff]
    %v87 = vld [vmem:[#allocation6 + $0x88] sm:$0xff]
    %v88 = vld [vmem:[#allocation6 + $0x90] sm:$0xff]
    %v89 = vld [vmem:[#allocation6 + $0x98] sm:$0xff]
    %v90 = vld [vmem:[#allocation6 + $0xa0] sm:$0xff]
    %v91 = vld [vmem:[#allocation6 + $0xa8] sm:$0xff]
    %v92 = vld [vmem:[#allocation6 + $0xb0] sm:$0xff]
    %v93 = vld [vmem:[#allocation6 + $0xb8] sm:$0xff]
    %v94 = vld [vmem:[#allocation6 + $0xc0] sm:$0xff]
    %v95 = vld [vmem:[#allocation6 + $0xc8] sm:$0xff]
    %v96 = vld [vmem:[#allocation6 + $0xd0] sm:$0xff]
    %v97 = vld [vmem:[#allocation6 + $0xd8] sm:$0xff]
    %v98 = vld [vmem:[#allocation6 + $0xe0] sm:$0xff]
    %v99 = vld [vmem:[#allocation6 + $0xe8] sm:$0xff]
    %v100 = vld [vmem:[#allocation6 + $0xf0] sm:$0xff]
    %v101 = vld [vmem:[#allocation6 + $0xf8] sm:$0xff]
    %v102 = vld [vmem:[#allocation6 + $0x100] sm:$0xff]
    %v103 = vld [vmem:[#allocation6 + $0x108] sm:$0xff]
    %v104 = vld [vmem:[#allocation6 + $0x110] sm:$0xff]
    %v105 = vld [vmem:[#allocation6 + $0x118] sm:$0xff]
    %v106 = vld [vmem:[#allocation6 + $0x120] sm:$0xff]
    %v107 = vld [vmem:[#allocation6 + $0x128] sm:$0xff]
    %v108 = vld [vmem:[#allocation6 + $0x130] sm:$0xff]
    %v109 = vld [vmem:[#allocation6 + $0x138] sm:$0xff]
    %v110 = vld [vmem:[#allocation6 + $0x140] sm:$0xff]
    %v111 = vld [vmem:[#allocation6 + $0x148] sm:$0xff]
    %v112 = vld [vmem:[#allocation6 + $0x150] sm:$0xff]
    %v113 = vld [vmem:[#allocation6 + $0x158] sm:$0xff]
    %v114 = vld [vmem:[#allocation6 + $0x160] sm:$0xff]
    %v115 = vld [vmem:[#allocation6 + $0x168] sm:$0xff]
    %v116 = vld [vmem:[#allocation6 + $0x170] sm:$0xff]
    %v117 = vld [vmem:[#allocation6 + $0x178] sm:$0xff]
    %v118 = vld [vmem:[%s4] sm:$0x7]
    %v120 = vlaneseq
    %v121 = vshrl.u32 %v120, 7
    %v122 = vsub.s32 0, %v121
    %v123 = vrot.slane %v118, %v122
    %v124 = vlaneseq
    %v125 = vshrl.u32 %v124, 7
    %v126 = vsub.s32 1, %v125
    %v127 = vrot.slane %v118, %v126
    %v128 = vlaneseq
    %v129 = vshrl.u32 %v128, 7
    %v130 = vsub.s32 2, %v129
    %v131 = vrot.slane %v118, %v130
    %135 = vmatprep.subr.mxu0 %v116
    %136 = vmatpush1.msra.mxu0 %v115
    %137 = vmatprep.subr.mxu0 %v113
    %138 = vmatpush1.msra.mxu0 %v112
    %139 = vmatprep.subr.mxu0 %v110
    %140 = vmatpush1.msra.mxu0 %v109
    %141 = vmatprep.subr.mxu0 %v107
    %142 = vmatpush1.msra.mxu0 %v106
    %143 = vmatprep.subr.mxu0 %v104
    %144 = vmatpush1.msra.mxu0 %v103
    %145 = vmatprep.subr.mxu0 %v101
    %146 = vmatpush1.msra.mxu0 %v100
    %147 = vmatprep.subr.mxu0 %v98
    %148 = vmatpush1.msra.mxu0 %v97
    %149 = vmatprep.subr.mxu0 %v95
    %150 = vmatpush1.msra.mxu0 %v94
    %151 = vmatprep.subr.mxu0 %v92
    %152 = vmatpush1.msra.mxu0 %v91
    %153 = vmatprep.subr.mxu0 %v89
    %154 = vmatpush1.msra.mxu0 %v88
    %155 = vmatprep.subr.mxu0 %v86
    %156 = vmatpush1.msra.mxu0 %v85
    %157 = vmatprep.subr.mxu0 %v83
    %158 = vmatpush1.msra.mxu0 %v82
    %159 = vmatprep.subr.mxu0 %v80
    %160 = vmatpush1.msra.mxu0 %v79
    %161 = vmatprep.subr.mxu0 %v77
    %162 = vmatpush1.msra.mxu0 %v76
    %163 = vmatprep.subr.mxu0 %v74
    %164 = vmatpush1.msra.mxu0 %v73
    %165 = vmatprep.subr.mxu0 %v71
    %166 = vmatpush1.msra.mxu0 %v70
    %167 = vmatprep.subr.mxu0 0.0
    %168 = vmatpush2.msra.mxu0 0.0
    %169 = vmatprep.subr.mxu0 0.0
    %170 = vmatpush2.msra.mxu0 0.0
    %171 = vmatprep.subr.mxu0 0.0
    %172 = vmatpush2.msra.mxu0 0.0
    %173 = vmatprep.subr.mxu0 0.0
    %174 = vmatpush2.msra.mxu0 0.0
    %175 = vmatprep.subr.mxu0 0.0
    %176 = vmatpush2.msra.mxu0 0.0
    %177 = vmatprep.subr.mxu0 0.0
    %178 = vmatpush2.msra.mxu0 0.0
    %179 = vmatprep.subr.mxu0 0.0
    %180 = vmatpush2.msra.mxu0 0.0
    %181 = vmatprep.subr.mxu0 0.0
    %182 = vmatpush2.msra.mxu0 0.0
    %183 = vmatprep.subr.mxu0 0.0
    %184 = vmatpush2.msra.mxu0 0.0
    %185 = vmatprep.subr.mxu0 0.0
    %186 = vmatpush2.msra.mxu0 0.0
    %187 = vmatprep.subr.mxu0 0.0
    %188 = vmatpush2.msra.mxu0 0.0
    %189 = vmatprep.subr.mxu0 0.0
    %190 = vmatpush2.msra.mxu0 0.0
    %191 = vmatprep.subr.mxu0 0.0
    %192 = vmatpush2.msra.mxu0 0.0
    %193 = vmatprep.subr.mxu0 0.0
    %194 = vmatpush2.msra.mxu0 0.0
    %195 = vmatprep.subr.mxu0 0.0
    %196 = vmatpush2.msra.mxu0 0.0
    %197 = vmatprep.subr.mxu0 0.0
    %198 = vmatpush2.msra.mxu0 0.0
    %199 = vmatprep.mubr.f32.mxu0 0.0
    %200 = vmatmul.mubr.f32.gmra.mxu0 %v69
    %v201 = vpop.f32.mrf.mxu0
    %v202 = vadd.f32 %v123, %v201
    %v203 = vpop.f32.mrf.mxu0
    %v204 = vadd.f32 %v127, %v203
    %205 = vdwg.mxu0
    %206 = vmatprep.subr.mxu0 0.0
    %207 = vmatpush1.msra.mxu0 %v117
    %208 = vmatprep.subr.mxu0 0.0
    %209 = vmatpush1.msra.mxu0 %v114
    %210 = vmatprep.subr.mxu0 0.0
    %211 = vmatpush1.msra.mxu0 %v111
    %212 = vmatprep.subr.mxu0 0.0
    %213 = vmatpush1.msra.mxu0 %v108
    %214 = vmatprep.subr.mxu0 0.0
    %215 = vmatpush1.msra.mxu0 %v105
    %216 = vmatprep.subr.mxu0 0.0
    %217 = vmatpush1.msra.mxu0 %v102
    %218 = vmatprep.subr.mxu0 0.0
    %219 = vmatpush1.msra.mxu0 %v99
    %220 = vmatprep.subr.mxu0 0.0
    %221 = vmatpush1.msra.mxu0 %v96
    %222 = vmatprep.subr.mxu0 0.0
    %223 = vmatpush1.msra.mxu0 %v93
    %224 = vmatprep.subr.mxu0 0.0
    %225 = vmatpush1.msra.mxu0 %v90
    %226 = vmatprep.subr.mxu0 0.0
    %227 = vmatpush1.msra.mxu0 %v87
    %228 = vmatprep.subr.mxu0 0.0
    %229 = vmatpush1.msra.mxu0 %v84
    %230 = vmatprep.subr.mxu0 0.0
    %231 = vmatpush1.msra.mxu0 %v81
    %232 = vmatprep.subr.mxu0 0.0
    %233 = vmatpush1.msra.mxu0 %v78
    %234 = vmatprep.subr.mxu0 0.0
    %235 = vmatpush1.msra.mxu0 %v75
    %236 = vmatprep.subr.mxu0 0.0
    %237 = vmatpush1.msra.mxu0 %v72
    %238 = vmatprep.subr.mxu0 0.0
    %239 = vmatpush2.msra.mxu0 0.0
    %240 = vmatprep.subr.mxu0 0.0
    %241 = vmatpush2.msra.mxu0 0.0
    %242 = vmatprep.subr.mxu0 0.0
    %243 = vmatpush2.msra.mxu0 0.0
    %244 = vmatprep.subr.mxu0 0.0
    %245 = vmatpush2.msra.mxu0 0.0
    %246 = vmatprep.subr.mxu0 0.0
    %247 = vmatpush2.msra.mxu0 0.0
    %248 = vmatprep.subr.mxu0 0.0
    %249 = vmatpush2.msra.mxu0 0.0
    %250 = vmatprep.subr.mxu0 0.0
    %251 = vmatpush2.msra.mxu0 0.0
    %252 = vmatprep.subr.mxu0 0.0
    %253 = vmatpush2.msra.mxu0 0.0
    %254 = vmatprep.subr.mxu0 0.0
    %255 = vmatpush2.msra.mxu0 0.0
    %256 = vmatprep.subr.mxu0 0.0
    %257 = vmatpush2.msra.mxu0 0.0
    %258 = vmatprep.subr.mxu0 0.0
    %259 = vmatpush2.msra.mxu0 0.0
    %260 = vmatprep.subr.mxu0 0.0
    %261 = vmatpush2.msra.mxu0 0.0
    %262 = vmatprep.subr.mxu0 0.0
    %263 = vmatpush2.msra.mxu0 0.0
    %264 = vmatprep.subr.mxu0 0.0
    %265 = vmatpush2.msra.mxu0 0.0
    %266 = vmatprep.subr.mxu0 0.0
    %267 = vmatpush2.msra.mxu0 0.0
    %268 = vmatprep.subr.mxu0 0.0
    %269 = vmatpush2.msra.mxu0 0.0
    %270 = vmatprep.mubr.f32.mxu0 0.0
    %271 = vmatmul.mubr.f32.gmra.mxu0 %v69
    %v272 = vpop.f32.mrf.mxu0
    %v273 = vadd.f32 %v131, %v272
    %v274 = vpop.f32.mrf.mxu0
    %275 = vdwg.mxu0
    %v276 = vld [vmem:[#allocation8] sm:$0xff]
    %v277 = vld [vmem:[#allocation8 + $0x8] sm:$0xff]
    %v278 = vld [vmem:[#allocation8 + $0x10] sm:$0xff]
    %v279 = vld [vmem:[#allocation8 + $0x18] sm:$0xff]
    %v280 = vld [vmem:[#allocation8 + $0x20] sm:$0xff]
    %v281 = vld [vmem:[#allocation8 + $0x28] sm:$0xff]
    %v282 = vld [vmem:[#allocation8 + $0x30] sm:$0xff]
    %v283 = vld [vmem:[#allocation8 + $0x38] sm:$0xff]
    %v284 = vld [vmem:[#allocation8 + $0x40] sm:$0xff]
    %v285 = vld [vmem:[#allocation8 + $0x48] sm:$0xff]
    %v286 = vld [vmem:[#allocation8 + $0x50] sm:$0xff]
    %v287 = vld [vmem:[#allocation8 + $0x58] sm:$0xff]
    %v288 = vld [vmem:[#allocation8 + $0x60] sm:$0xff]
    %v289 = vld [vmem:[#allocation8 + $0x68] sm:$0xff]
    %v290 = vld [vmem:[#allocation8 + $0x70] sm:$0xff]
    %v291 = vld [vmem:[#allocation8 + $0x78] sm:$0xff]
    %v292 = vld [vmem:[#allocation8 + $0x80] sm:$0xff]
    %v293 = vld [vmem:[#allocation8 + $0x88] sm:$0xff]
    %v294 = vld [vmem:[#allocation8 + $0x90] sm:$0xff]
    %v295 = vld [vmem:[#allocation8 + $0x98] sm:$0xff]
    %v296 = vld [vmem:[#allocation8 + $0xa0] sm:$0xff]
    %v297 = vld [vmem:[#allocation8 + $0xa8] sm:$0xff]
    %v298 = vld [vmem:[#allocation8 + $0xb0] sm:$0xff]
    %v299 = vld [vmem:[#allocation8 + $0xb8] sm:$0xff]
    %v300 = vld [vmem:[#allocation8 + $0xc0] sm:$0xff]
    %v301 = vld [vmem:[#allocation8 + $0xc8] sm:$0xff]
    %v302 = vld [vmem:[#allocation8 + $0xd0] sm:$0xff]
    %v303 = vld [vmem:[#allocation8 + $0xd8] sm:$0xff]
    %v304 = vld [vmem:[#allocation8 + $0xe0] sm:$0xff]
    %v305 = vld [vmem:[#allocation8 + $0xe8] sm:$0xff]
    %v306 = vld [vmem:[#allocation8 + $0xf0] sm:$0xff]
    %v307 = vld [vmem:[#allocation8 + $0xf8] sm:$0xff]
    %v308 = vld [vmem:[#allocation8 + $0x100] sm:$0xff]
    %v309 = vld [vmem:[#allocation8 + $0x108] sm:$0xff]
    %v310 = vld [vmem:[#allocation8 + $0x110] sm:$0xff]
    %v311 = vld [vmem:[#allocation8 + $0x118] sm:$0xff]
    %v312 = vld [vmem:[#allocation8 + $0x120] sm:$0xff]
    %v313 = vld [vmem:[#allocation8 + $0x128] sm:$0xff]
    %v314 = vld [vmem:[#allocation8 + $0x130] sm:$0xff]
    %v315 = vld [vmem:[#allocation8 + $0x138] sm:$0xff]
    %v316 = vld [vmem:[#allocation8 + $0x140] sm:$0xff]
    %v317 = vld [vmem:[#allocation8 + $0x148] sm:$0xff]
    %v318 = vld [vmem:[#allocation8 + $0x150] sm:$0xff]
    %v319 = vld [vmem:[#allocation8 + $0x158] sm:$0xff]
    %v320 = vld [vmem:[#allocation8 + $0x160] sm:$0xff]
    %v321 = vld [vmem:[#allocation8 + $0x168] sm:$0xff]
    %v322 = vld [vmem:[#allocation8 + $0x170] sm:$0xff]
    %v323 = vld [vmem:[#allocation8 + $0x178] sm:$0xff]
    %v324 = vld [vmem:[%s5] sm:$0x1]
    %v325 = vld [vmem:[#allocation2] sm:$0x1]
    %326 = vmatprep.subr.mxu0 %v322
    %327 = vmatpush1.msra.mxu0 %v321
    %328 = vmatprep.subr.mxu0 %v319
    %329 = vmatpush1.msra.mxu0 %v318
    %330 = vmatprep.subr.mxu0 %v316
    %331 = vmatpush1.msra.mxu0 %v315
    %332 = vmatprep.subr.mxu0 %v313
    %333 = vmatpush1.msra.mxu0 %v312
    %334 = vmatprep.subr.mxu0 %v310
    %335 = vmatpush1.msra.mxu0 %v309
    %336 = vmatprep.subr.mxu0 %v307
    %337 = vmatpush1.msra.mxu0 %v306
    %338 = vmatprep.subr.mxu0 %v304
    %339 = vmatpush1.msra.mxu0 %v303
    %340 = vmatprep.subr.mxu0 %v301
    %341 = vmatpush1.msra.mxu0 %v300
    %342 = vmatprep.subr.mxu0 %v298
    %343 = vmatpush1.msra.mxu0 %v297
    %344 = vmatprep.subr.mxu0 %v295
    %345 = vmatpush1.msra.mxu0 %v294
    %346 = vmatprep.subr.mxu0 %v292
    %347 = vmatpush1.msra.mxu0 %v291
    %348 = vmatprep.subr.mxu0 %v289
    %349 = vmatpush1.msra.mxu0 %v288
    %350 = vmatprep.subr.mxu0 %v286
    %351 = vmatpush1.msra.mxu0 %v285
    %352 = vmatprep.subr.mxu0 %v283
    %353 = vmatpush1.msra.mxu0 %v282
    %354 = vmatprep.subr.mxu0 %v280
    %355 = vmatpush1.msra.mxu0 %v279
    %356 = vmatprep.subr.mxu0 %v277
    %357 = vmatpush1.msra.mxu0 %v276
    %358 = vmatprep.subr.mxu0 0.0
    %359 = vmatpush2.msra.mxu0 0.0
    %360 = vmatprep.subr.mxu0 0.0
    %361 = vmatpush2.msra.mxu0 0.0
    %362 = vmatprep.subr.mxu0 0.0
    %363 = vmatpush2.msra.mxu0 0.0
    %364 = vmatprep.subr.mxu0 0.0
    %365 = vmatpush2.msra.mxu0 0.0
    %366 = vmatprep.subr.mxu0 0.0
    %367 = vmatpush2.msra.mxu0 0.0
    %368 = vmatprep.subr.mxu0 0.0
    %369 = vmatpush2.msra.mxu0 0.0
    %370 = vmatprep.subr.mxu0 0.0
    %371 = vmatpush2.msra.mxu0 0.0
    %372 = vmatprep.subr.mxu0 0.0
    %373 = vmatpush2.msra.mxu0 0.0
    %374 = vmatprep.subr.mxu0 0.0
    %375 = vmatpush2.msra.mxu0 0.0
    %376 = vmatprep.subr.mxu0 0.0
    %377 = vmatpush2.msra.mxu0 0.0
    %378 = vmatprep.subr.mxu0 0.0
    %379 = vmatpush2.msra.mxu0 0.0
    %380 = vmatprep.subr.mxu0 0.0
    %381 = vmatpush2.msra.mxu0 0.0
    %382 = vmatprep.subr.mxu0 0.0
    %383 = vmatpush2.msra.mxu0 0.0
    %384 = vmatprep.subr.mxu0 0.0
    %385 = vmatpush2.msra.mxu0 0.0
    %386 = vmatprep.subr.mxu0 0.0
    %387 = vmatpush2.msra.mxu0 0.0
    %388 = vmatprep.subr.mxu0 0.0
    %389 = vmatpush2.msra.mxu0 0.0
    %390 = vmatprep.mubr.f32.mxu0 0.0
    %391 = vmatmul.mubr.f32.gmra.mxu0 %v325
    %v392 = vpop.f32.mrf.mxu0
    %v393 = vadd.f32 0.0, %v392
    %v394 = vpop.f32.mrf.mxu0
    %v395 = vadd.f32 0.0, %v394
    %396 = vdwg.mxu0
    %397 = vmatprep.subr.mxu0 0.0
    %398 = vmatpush1.msra.mxu0 %v323
    %399 = vmatprep.subr.mxu0 0.0
    %400 = vmatpush1.msra.mxu0 %v320
    %401 = vmatprep.subr.mxu0 0.0
    %402 = vmatpush1.msra.mxu0 %v317
    %403 = vmatprep.subr.mxu0 0.0
    %404 = vmatpush1.msra.mxu0 %v314
    %405 = vmatprep.subr.mxu0 0.0
    %406 = vmatpush1.msra.mxu0 %v311
    %407 = vmatprep.subr.mxu0 0.0
    %408 = vmatpush1.msra.mxu0 %v308
    %409 = vmatprep.subr.mxu0 0.0
    %410 = vmatpush1.msra.mxu0 %v305
    %411 = vmatprep.subr.mxu0 0.0
    %412 = vmatpush1.msra.mxu0 %v302
    %413 = vmatprep.subr.mxu0 0.0
    %414 = vmatpush1.msra.mxu0 %v299
    %415 = vmatprep.subr.mxu0 0.0
    %416 = vmatpush1.msra.mxu0 %v296
    %417 = vmatprep.subr.mxu0 0.0
    %418 = vmatpush1.msra.mxu0 %v293
    %419 = vmatprep.subr.mxu0 0.0
    %420 = vmatpush1.msra.mxu0 %v290
    %421 = vmatprep.subr.mxu0 0.0
    %422 = vmatpush1.msra.mxu0 %v287
    %423 = vmatprep.subr.mxu0 0.0
    %424 = vmatpush1.msra.mxu0 %v284
    %425 = vmatprep.subr.mxu0 0.0
    %426 = vmatpush1.msra.mxu0 %v281
    %427 = vmatprep.subr.mxu0 0.0
    %428 = vmatpush1.msra.mxu0 %v278
    %429 = vmatprep.subr.mxu0 0.0
    %430 = vmatpush2.msra.mxu0 0.0
    %431 = vmatprep.subr.mxu0 0.0
    %432 = vmatpush2.msra.mxu0 0.0
    %433 = vmatprep.subr.mxu0 0.0
    %434 = vmatpush2.msra.mxu0 0.0
    %435 = vmatprep.subr.mxu0 0.0
    %436 = vmatpush2.msra.mxu0 0.0
    %437 = vmatprep.subr.mxu0 0.0
    %438 = vmatpush2.msra.mxu0 0.0
    %439 = vmatprep.subr.mxu0 0.0
    %440 = vmatpush2.msra.mxu0 0.0
    %441 = vmatprep.subr.mxu0 0.0
    %442 = vmatpush2.msra.mxu0 0.0
    %443 = vmatprep.subr.mxu0 0.0
    %444 = vmatpush2.msra.mxu0 0.0
    %445 = vmatprep.subr.mxu0 0.0
    %446 = vmatpush2.msra.mxu0 0.0
    %447 = vmatprep.subr.mxu0 0.0
    %448 = vmatpush2.msra.mxu0 0.0
    %449 = vmatprep.subr.mxu0 0.0
    %450 = vmatpush2.msra.mxu0 0.0
    %451 = vmatprep.subr.mxu0 0.0
    %452 = vmatpush2.msra.mxu0 0.0
    %453 = vmatprep.subr.mxu0 0.0
    %454 = vmatpush2.msra.mxu0 0.0
    %455 = vmatprep.subr.mxu0 0.0
    %456 = vmatpush2.msra.mxu0 0.0
    %457 = vmatprep.subr.mxu0 0.0
    %458 = vmatpush2.msra.mxu0 0.0
    %459 = vmatprep.subr.mxu0 0.0
    %460 = vmatpush2.msra.mxu0 0.0
    %461 = vmatprep.mubr.f32.mxu0 0.0
    %462 = vmatmul.mubr.f32.gmra.mxu0 %v325
    %v463 = vpop.f32.mrf.mxu0
    %v464 = vadd.f32 0.0, %v463
    %v465 = vpop.f32.mrf.mxu0
    %466 = vdwg.mxu0
    %v467 = vadd.f32 %v202, %v393
    %v468 = vxor.u32 %v467, 2147483648
    %v469 = vmul.f32 %v468, 1.442695
    %v470 = vpow.pop %v469
    %v471 = vadd.f32 %v470, 1.0
    %v472 = vrcp.pop %v471
    %v473 = vmul.f32 1.0, %v472
    %v474 = vadd.f32 %v204, %v395
    %v475 = vxor.u32 %v474, 2147483648
    %v476 = vmul.f32 %v475, 1.442695
    %v477 = vpow.pop %v476
    %v478 = vadd.f32 %v477, 1.0
    %v479 = vrcp.pop %v478
    %v480 = vmul.f32 1.0, %v479
    %v481 = vadd.f32 %v464, %v324
    %v482 = vmul.f32 %v473, %v481
    %v483 = vadd.f32 %v273, %v482
    %v484 = vtanh.pop %v483
    %v485 = vsub.f32 1.0, %v480
    %v486 = vmul.f32 %v485, %v484
    %v487 = vmul.f32 %v480, %v325
    %v488 = vadd.f32 %v486, %v487
    %489 = vmatprep.subr.mxu0 %v322
    %490 = vmatpush1.msra.mxu0 %v321
    %491 = vmatprep.subr.mxu0 %v319
    %492 = vmatpush1.msra.mxu0 %v318
    %493 = vmatprep.subr.mxu0 %v316
    %494 = vmatpush1.msra.mxu0 %v315
    %495 = vmatprep.subr.mxu0 %v313
    %496 = vmatpush1.msra.mxu0 %v312
    %497 = vmatprep.subr.mxu0 %v310
    %498 = vmatpush1.msra.mxu0 %v309
    %499 = vmatprep.subr.mxu0 %v307
    %500 = vmatpush1.msra.mxu0 %v306
    %501 = vmatprep.subr.mxu0 %v304
    %502 = vmatpush1.msra.mxu0 %v303
    %503 = vmatprep.subr.mxu0 %v301
    %504 = vmatpush1.msra.mxu0 %v300
    %505 = vmatprep.subr.mxu0 %v298
    %506 = vmatpush1.msra.mxu0 %v297
    %507 = vmatprep.subr.mxu0 %v295
    %508 = vmatpush1.msra.mxu0 %v294
    %509 = vmatprep.subr.mxu0 %v292
    %510 = vmatpush1.msra.mxu0 %v291
    %511 = vmatprep.subr.mxu0 %v289
    %512 = vmatpush1.msra.mxu0 %v288
    %513 = vmatprep.subr.mxu0 %v286
    %514 = vmatpush1.msra.mxu0 %v285
    %515 = vmatprep.subr.mxu0 %v283
    %516 = vmatpush1.msra.mxu0 %v282
    %517 = vmatprep.subr.mxu0 %v280
    %518 = vmatpush1.msra.mxu0 %v279
    %519 = vmatprep.subr.mxu0 %v277
    %520 = vmatpush1.msra.mxu0 %v276
    %521 = vmatprep.subr.mxu0 0.0
    %522 = vmatpush2.msra.mxu0 0.0
    %523 = vmatprep.subr.mxu0 0.0
    %524 = vmatpush2.msra.mxu0 0.0
    %525 = vmatprep.subr.mxu0 0.0
    %526 = vmatpush2.msra.mxu0 0.0
    %527 = vmatprep.subr.mxu0 0.0
    %528 = vmatpush2.msra.mxu0 0.0
    %529 = vmatprep.subr.mxu0 0.0
    %530 = vmatpush2.msra.mxu0 0.0
    %531 = vmatprep.subr.mxu0 0.0
    %532 = vmatpush2.msra.mxu0 0.0
    %533 = vmatprep.subr.mxu0 0.0
    %534 = vmatpush2.msra.mxu0 0.0
    %535 = vmatprep.subr.mxu0 0.0
    %536 = vmatpush2.msra.mxu0 0.0
    %537 = vmatprep.subr.mxu0 0.0
    %538 = vmatpush2.msra.mxu0 0.0
    %539 = vmatprep.subr.mxu0 0.0
    %540 = vmatpush2.msra.mxu0 0.0
    %541 = vmatprep.subr.mxu0 0.0
    %542 = vmatpush2.msra.mxu0 0.0
    %543 = vmatprep.subr.mxu0 0.0
    %544 = vmatpush2.msra.mxu0 0.0
    %545 = vmatprep.subr.mxu0 0.0
    %546 = vmatpush2.msra.mxu0 0.0
    %547 = vmatprep.subr.mxu0 0.0
    %548 = vmatpush2.msra.mxu0 0.0
    %549 = vmatprep.subr.mxu0 0.0
    %550 = vmatpush2.msra.mxu0 0.0
    %551 = vmatprep.subr.mxu0 0.0
    %552 = vmatpush2.msra.mxu0 0.0
    %553 = vmatprep.mubr.f32.mxu0 0.0
    %554 = vmatmul.mubr.f32.gmra.mxu0 %v488
    %v555 = vpop.f32.mrf.mxu0
    %v556 = vadd.f32 0.0, %v555
    %v557 = vpop.f32.mrf.mxu0
    %v558 = vadd.f32 0.0, %v557
    %559 = vdwg.mxu0
    %560 = vmatprep.subr.mxu0 0.0
    %561 = vmatpush1.msra.mxu0 %v323
    %562 = vmatprep.subr.mxu0 0.0
    %563 = vmatpush1.msra.mxu0 %v320
    %564 = vmatprep.subr.mxu0 0.0
    %565 = vmatpush1.msra.mxu0 %v317
    %566 = vmatprep.subr.mxu0 0.0
    %567 = vmatpush1.msra.mxu0 %v314
    %568 = vmatprep.subr.mxu0 0.0
    %569 = vmatpush1.msra.mxu0 %v311
    %570 = vmatprep.subr.mxu0 0.0
    %571 = vmatpush1.msra.mxu0 %v308
    %572 = vmatprep.subr.mxu0 0.0
    %573 = vmatpush1.msra.mxu0 %v305
    %574 = vmatprep.subr.mxu0 0.0
    %575 = vmatpush1.msra.mxu0 %v302
    %576 = vmatprep.subr.mxu0 0.0
    %577 = vmatpush1.msra.mxu0 %v299
    %578 = vmatprep.subr.mxu0 0.0
    %579 = vmatpush1.msra.mxu0 %v296
    %580 = vmatprep.subr.mxu0 0.0
    %581 = vmatpush1.msra.mxu0 %v293
    %582 = vmatprep.subr.mxu0 0.0
    %583 = vmatpush1.msra.mxu0 %v290
    %584 = vmatprep.subr.mxu0 0.0
    %585 = vmatpush1.msra.mxu0 %v287
    %586 = vmatprep.subr.mxu0 0.0
    %587 = vmatpush1.msra.mxu0 %v284
    %588 = vmatprep.subr.mxu0 0.0
    %589 = vmatpush1.msra.mxu0 %v281
    %590 = vmatprep.subr.mxu0 0.0
    %591 = vmatpush1.msra.mxu0 %v278
    %592 = vmatprep.subr.mxu0 0.0
    %593 = vmatpush2.msra.mxu0 0.0
    %594 = vmatprep.subr.mxu0 0.0
    %595 = vmatpush2.msra.mxu0 0.0
    %596 = vmatprep.subr.mxu0 0.0
    %597 = vmatpush2.msra.mxu0 0.0
    %598 = vmatprep.subr.mxu0 0.0
    %599 = vmatpush2.msra.mxu0 0.0
    %600 = vmatprep.subr.mxu0 0.0
    %601 = vmatpush2.msra.mxu0 0.0
    %602 = vmatprep.subr.mxu0 0.0
    %603 = vmatpush2.msra.mxu0 0.0
    %604 = vmatprep.subr.mxu0 0.0
    %605 = vmatpush2.msra.mxu0 0.0
    %606 = vmatprep.subr.mxu0 0.0
    %607 = vmatpush2.msra.mxu0 0.0
    %608 = vmatprep.subr.mxu0 0.0
    %609 = vmatpush2.msra.mxu0 0.0
    %610 = vmatprep.subr.mxu0 0.0
    %611 = vmatpush2.msra.mxu0 0.0
    %612 = vmatprep.subr.mxu0 0.0
    %613 = vmatpush2.msra.mxu0 0.0
    %614 = vmatprep.subr.mxu0 0.0
    %615 = vmatpush2.msra.mxu0 0.0
    %616 = vmatprep.subr.mxu0 0.0
    %617 = vmatpush2.msra.mxu0 0.0
    %618 = vmatprep.subr.mxu0 0.0
    %619 = vmatpush2.msra.mxu0 0.0
    %620 = vmatprep.subr.mxu0 0.0
    %621 = vmatpush2.msra.mxu0 0.0
    %622 = vmatprep.subr.mxu0 0.0
    %623 = vmatpush2.msra.mxu0 0.0
    %624 = vmatprep.mubr.f32.mxu0 0.0
    %625 = vmatmul.mubr.f32.gmra.mxu0 %v488
    %v626 = vpop.f32.mrf.mxu0
    %v627 = vadd.f32 0.0, %v626
    %v628 = vpop.f32.mrf.mxu0
    %629 = vdwg.mxu0
    %v631 = vrot.slane %v556, 7
    %v633 = vadd.f32 %v202, %v631
    %v634 = vxor.u32 %v633, 2147483648
    %v635 = vmul.f32 %v634, 1.442695
    %v636 = vpow.pop %v635
    %v637 = vadd.f32 %v636, 1.0
    %v638 = vrcp.pop %v637
    %v639 = vmul.f32 1.0, %v638
    %v641 = vrot.slane %v558, 7
    %v643 = vadd.f32 %v204, %v641
    %v644 = vxor.u32 %v643, 2147483648
    %v645 = vmul.f32 %v644, 1.442695
    %v646 = vpow.pop %v645
    %v647 = vadd.f32 %v646, 1.0
    %v648 = vrcp.pop %v647
    %v649 = vmul.f32 1.0, %v648
    %v650 = vadd.f32 %v627, %v324
    %v652 = vrot.slane %v650, 7
    %v654 = vmul.f32 %v639, %v652
    %v655 = vadd.f32 %v273, %v654
    %v656 = vtanh.pop %v655
    %v657 = vsub.f32 1.0, %v649
    %v658 = vmul.f32 %v657, %v656
    %v660 = vrot.slane %v488, 7
    %v662 = vmul.f32 %v649, %v660
    %v663 = vadd.f32 %v658, %v662
    %v665 = vrot.slane %v663, 1
    %667 = vmatprep.subr.mxu0 %v322
    %668 = vmatpush1.msra.mxu0 %v321
    %669 = vmatprep.subr.mxu0 %v319
    %670 = vmatpush1.msra.mxu0 %v318
    %671 = vmatprep.subr.mxu0 %v316
    %672 = vmatpush1.msra.mxu0 %v315
    %673 = vmatprep.subr.mxu0 %v313
    %674 = vmatpush1.msra.mxu0 %v312
    %675 = vmatprep.subr.mxu0 %v310
    %676 = vmatpush1.msra.mxu0 %v309
    %677 = vmatprep.subr.mxu0 %v307
    %678 = vmatpush1.msra.mxu0 %v306
    %679 = vmatprep.subr.mxu0 %v304
    %680 = vmatpush1.msra.mxu0 %v303
    %681 = vmatprep.subr.mxu0 %v301
    %682 = vmatpush1.msra.mxu0 %v300
    %683 = vmatprep.subr.mxu0 %v298
    %684 = vmatpush1.msra.mxu0 %v297
    %685 = vmatprep.subr.mxu0 %v295
    %686 = vmatpush1.msra.mxu0 %v294
    %687 = vmatprep.subr.mxu0 %v292
    %688 = vmatpush1.msra.mxu0 %v291
    %689 = vmatprep.subr.mxu0 %v289
    %690 = vmatpush1.msra.mxu0 %v288
    %691 = vmatprep.subr.mxu0 %v286
    %692 = vmatpush1.msra.mxu0 %v285
    %693 = vmatprep.subr.mxu0 %v283
    %694 = vmatpush1.msra.mxu0 %v282
    %695 = vmatprep.subr.mxu0 %v280
    %696 = vmatpush1.msra.mxu0 %v279
    %697 = vmatprep.subr.mxu0 %v277
    %698 = vmatpush1.msra.mxu0 %v276
    %699 = vmatprep.subr.mxu0 0.0
    %700 = vmatpush2.msra.mxu0 0.0
    %701 = vmatprep.subr.mxu0 0.0
    %702 = vmatpush2.msra.mxu0 0.0
    %703 = vmatprep.subr.mxu0 0.0
    %704 = vmatpush2.msra.mxu0 0.0
    %705 = vmatprep.subr.mxu0 0.0
    %706 = vmatpush2.msra.mxu0 0.0
    %707 = vmatprep.subr.mxu0 0.0
    %708 = vmatpush2.msra.mxu0 0.0
    %709 = vmatprep.subr.mxu0 0.0
    %710 = vmatpush2.msra.mxu0 0.0
    %711 = vmatprep.subr.mxu0 0.0
    %712 = vmatpush2.msra.mxu0 0.0
    %713 = vmatprep.subr.mxu0 0.0
    %714 = vmatpush2.msra.mxu0 0.0
    %715 = vmatprep.subr.mxu0 0.0
    %716 = vmatpush2.msra.mxu0 0.0
    %717 = vmatprep.subr.mxu0 0.0
    %718 = vmatpush2.msra.mxu0 0.0
    %719 = vmatprep.subr.mxu0 0.0
    %720 = vmatpush2.msra.mxu0 0.0
    %721 = vmatprep.subr.mxu0 0.0
    %722 = vmatpush2.msra.mxu0 0.0
    %723 = vmatprep.subr.mxu0 0.0
    %724 = vmatpush2.msra.mxu0 0.0
    %725 = vmatprep.subr.mxu0 0.0
    %726 = vmatpush2.msra.mxu0 0.0
    %727 = vmatprep.subr.mxu0 0.0
    %728 = vmatpush2.msra.mxu0 0.0
    %729 = vmatprep.subr.mxu0 0.0
    %730 = vmatpush2.msra.mxu0 0.0
    %731 = vmatprep.mubr.f32.mxu0 0.0
    %732 = vmatmul.mubr.f32.gmra.mxu0 %v665
    %v733 = vpop.f32.mrf.mxu0
    %v734 = vadd.f32 0.0, %v733
    %v735 = vpop.f32.mrf.mxu0
    %v736 = vadd.f32 0.0, %v735
    %737 = vdwg.mxu0
    %738 = vmatprep.subr.mxu0 0.0
    %739 = vmatpush1.msra.mxu0 %v323
    %740 = vmatprep.subr.mxu0 0.0
    %741 = vmatpush1.msra.mxu0 %v320
    %742 = vmatprep.subr.mxu0 0.0
    %743 = vmatpush1.msra.mxu0 %v317
    %744 = vmatprep.subr.mxu0 0.0
    %745 = vmatpush1.msra.mxu0 %v314
    %746 = vmatprep.subr.mxu0 0.0
    %747 = vmatpush1.msra.mxu0 %v311
    %748 = vmatprep.subr.mxu0 0.0
    %749 = vmatpush1.msra.mxu0 %v308
    %750 = vmatprep.subr.mxu0 0.0
    %751 = vmatpush1.msra.mxu0 %v305
    %752 = vmatprep.subr.mxu0 0.0
    %753 = vmatpush1.msra.mxu0 %v302
    %754 = vmatprep.subr.mxu0 0.0
    %755 = vmatpush1.msra.mxu0 %v299
    %756 = vmatprep.subr.mxu0 0.0
    %757 = vmatpush1.msra.mxu0 %v296
    %758 = vmatprep.subr.mxu0 0.0
    %759 = vmatpush1.msra.mxu0 %v293
    %760 = vmatprep.subr.mxu0 0.0
    %761 = vmatpush1.msra.mxu0 %v290
    %762 = vmatprep.subr.mxu0 0.0
    %763 = vmatpush1.msra.mxu0 %v287
    %764 = vmatprep.subr.mxu0 0.0
    %765 = vmatpush1.msra.mxu0 %v284
    %766 = vmatprep.subr.mxu0 0.0
    %767 = vmatpush1.msra.mxu0 %v281
    %768 = vmatprep.subr.mxu0 0.0
    %769 = vmatpush1.msra.mxu0 %v278
    %770 = vmatprep.subr.mxu0 0.0
    %771 = vmatpush2.msra.mxu0 0.0
    %772 = vmatprep.subr.mxu0 0.0
    %773 = vmatpush2.msra.mxu0 0.0
    %774 = vmatprep.subr.mxu0 0.0
    %775 = vmatpush2.msra.mxu0 0.0
    %776 = vmatprep.subr.mxu0 0.0
    %777 = vmatpush2.msra.mxu0 0.0
    %778 = vmatprep.subr.mxu0 0.0
    %779 = vmatpush2.msra.mxu0 0.0
    %780 = vmatprep.subr.mxu0 0.0
    %781 = vmatpush2.msra.mxu0 0.0
    %782 = vmatprep.subr.mxu0 0.0
    %783 = vmatpush2.msra.mxu0 0.0
    %784 = vmatprep.subr.mxu0 0.0
    %785 = vmatpush2.msra.mxu0 0.0
    %786 = vmatprep.subr.mxu0 0.0
    %787 = vmatpush2.msra.mxu0 0.0
    %788 = vmatprep.subr.mxu0 0.0
    %789 = vmatpush2.msra.mxu0 0.0
    %790 = vmatprep.subr.mxu0 0.0
    %791 = vmatpush2.msra.mxu0 0.0
    %792 = vmatprep.subr.mxu0 0.0
    %793 = vmatpush2.msra.mxu0 0.0
    %794 = vmatprep.subr.mxu0 0.0
    %795 = vmatpush2.msra.mxu0 0.0
    %796 = vmatprep.subr.mxu0 0.0
    %797 = vmatpush2.msra.mxu0 0.0
    %798 = vmatprep.subr.mxu0 0.0
    %799 = vmatpush2.msra.mxu0 0.0
    %800 = vmatprep.subr.mxu0 0.0
    %801 = vmatpush2.msra.mxu0 0.0
    %802 = vmatprep.mubr.f32.mxu0 0.0
    %803 = vmatmul.mubr.f32.gmra.mxu0 %v665
    %v804 = vpop.f32.mrf.mxu0
    %v805 = vadd.f32 0.0, %v804
    %v806 = vpop.f32.mrf.mxu0
    %807 = vdwg.mxu0
    %v809 = vrot.slane %v734, 6
    %v811 = vadd.f32 %v202, %v809
    %v812 = vxor.u32 %v811, 2147483648
    %v813 = vmul.f32 %v812, 1.442695
    %v814 = vpow.pop %v813
    %v815 = vadd.f32 %v814, 1.0
    %v816 = vrcp.pop %v815
    %v817 = vmul.f32 1.0, %v816
    %v819 = vrot.slane %v736, 6
    %v821 = vadd.f32 %v204, %v819
    %v822 = vxor.u32 %v821, 2147483648
    %v823 = vmul.f32 %v822, 1.442695
    %v824 = vpow.pop %v823
    %v825 = vadd.f32 %v824, 1.0
    %v826 = vrcp.pop %v825
    %v827 = vmul.f32 1.0, %v826
    %v828 = vadd.f32 %v805, %v324
    %v830 = vrot.slane %v828, 6
    %v832 = vmul.f32 %v817, %v830
    %v833 = vadd.f32 %v273, %v832
    %v834 = vtanh.pop %v833
    %v835 = vsub.f32 1.0, %v827
    %v836 = vmul.f32 %v835, %v834
    %v837 = vrot.slane %v663, 7
    %v839 = vmul.f32 %v827, %v837
    %v840 = vadd.f32 %v836, %v839
    %v842 = vrot.slane %v840, 2
    %844 = vmatprep.subr.mxu0 %v322
    %845 = vmatpush1.msra.mxu0 %v321
    %846 = vmatprep.subr.mxu0 %v319
    %847 = vmatpush1.msra.mxu0 %v318
    %848 = vmatprep.subr.mxu0 %v316
    %849 = vmatpush1.msra.mxu0 %v315
    %850 = vmatprep.subr.mxu0 %v313
    %851 = vmatpush1.msra.mxu0 %v312
    %852 = vmatprep.subr.mxu0 %v310
    %853 = vmatpush1.msra.mxu0 %v309
    %854 = vmatprep.subr.mxu0 %v307
    %855 = vmatpush1.msra.mxu0 %v306
    %856 = vmatprep.subr.mxu0 %v304
    %857 = vmatpush1.msra.mxu0 %v303
    %858 = vmatprep.subr.mxu0 %v301
    %859 = vmatpush1.msra.mxu0 %v300
    %860 = vmatprep.subr.mxu0 %v298
    %861 = vmatpush1.msra.mxu0 %v297
    %862 = vmatprep.subr.mxu0 %v295
    %863 = vmatpush1.msra.mxu0 %v294
    %864 = vmatprep.subr.mxu0 %v292
    %865 = vmatpush1.msra.mxu0 %v291
    %866 = vmatprep.subr.mxu0 %v289
    %867 = vmatpush1.msra.mxu0 %v288
    %868 = vmatprep.subr.mxu0 %v286
    %869 = vmatpush1.msra.mxu0 %v285
    %870 = vmatprep.subr.mxu0 %v283
    %871 = vmatpush1.msra.mxu0 %v282
    %872 = vmatprep.subr.mxu0 %v280
    %873 = vmatpush1.msra.mxu0 %v279
    %874 = vmatprep.subr.mxu0 %v277
    %875 = vmatpush1.msra.mxu0 %v276
    %876 = vmatprep.subr.mxu0 0.0
    %877 = vmatpush2.msra.mxu0 0.0
    %878 = vmatprep.subr.mxu0 0.0
    %879 = vmatpush2.msra.mxu0 0.0
    %880 = vmatprep.subr.mxu0 0.0
    %881 = vmatpush2.msra.mxu0 0.0
    %882 = vmatprep.subr.mxu0 0.0
    %883 = vmatpush2.msra.mxu0 0.0
    %884 = vmatprep.subr.mxu0 0.0
    %885 = vmatpush2.msra.mxu0 0.0
    %886 = vmatprep.subr.mxu0 0.0
    %887 = vmatpush2.msra.mxu0 0.0
    %888 = vmatprep.subr.mxu0 0.0
    %889 = vmatpush2.msra.mxu0 0.0
    %890 = vmatprep.subr.mxu0 0.0
    %891 = vmatpush2.msra.mxu0 0.0
    %892 = vmatprep.subr.mxu0 0.0
    %893 = vmatpush2.msra.mxu0 0.0
    %894 = vmatprep.subr.mxu0 0.0
    %895 = vmatpush2.msra.mxu0 0.0
    %896 = vmatprep.subr.mxu0 0.0
    %897 = vmatpush2.msra.mxu0 0.0
    %898 = vmatprep.subr.mxu0 0.0
    %899 = vmatpush2.msra.mxu0 0.0
    %900 = vmatprep.subr.mxu0 0.0
    %901 = vmatpush2.msra.mxu0 0.0
    %902 = vmatprep.subr.mxu0 0.0
    %903 = vmatpush2.msra.mxu0 0.0
    %904 = vmatprep.subr.mxu0 0.0
    %905 = vmatpush2.msra.mxu0 0.0
    %906 = vmatprep.subr.mxu0 0.0
    %907 = vmatpush2.msra.mxu0 0.0
    %908 = vmatprep.mubr.f32.mxu0 0.0
    %909 = vmatmul.mubr.f32.gmra.mxu0 %v842
    %v910 = vpop.f32.mrf.mxu0
    %v911 = vadd.f32 0.0, %v910
    %v912 = vpop.f32.mrf.mxu0
    %v913 = vadd.f32 0.0, %v912
    %914 = vdwg.mxu0
    %915 = vmatprep.subr.mxu0 0.0
    %916 = vmatpush1.msra.mxu0 %v323
    %917 = vmatprep.subr.mxu0 0.0
    %918 = vmatpush1.msra.mxu0 %v320
    %919 = vmatprep.subr.mxu0 0.0
    %920 = vmatpush1.msra.mxu0 %v317
    %921 = vmatprep.subr.mxu0 0.0
    %922 = vmatpush1.msra.mxu0 %v314
    %923 = vmatprep.subr.mxu0 0.0
    %924 = vmatpush1.msra.mxu0 %v311
    %925 = vmatprep.subr.mxu0 0.0
    %926 = vmatpush1.msra.mxu0 %v308
    %927 = vmatprep.subr.mxu0 0.0
    %928 = vmatpush1.msra.mxu0 %v305
    %929 = vmatprep.subr.mxu0 0.0
    %930 = vmatpush1.msra.mxu0 %v302
    %931 = vmatprep.subr.mxu0 0.0
    %932 = vmatpush1.msra.mxu0 %v299
    %933 = vmatprep.subr.mxu0 0.0
    %934 = vmatpush1.msra.mxu0 %v296
    %935 = vmatprep.subr.mxu0 0.0
    %936 = vmatpush1.msra.mxu0 %v293
    %937 = vmatprep.subr.mxu0 0.0
    %938 = vmatpush1.msra.mxu0 %v290
    %939 = vmatprep.subr.mxu0 0.0
    %940 = vmatpush1.msra.mxu0 %v287
    %941 = vmatprep.subr.mxu0 0.0
    %942 = vmatpush1.msra.mxu0 %v284
    %943 = vmatprep.subr.mxu0 0.0
    %944 = vmatpush1.msra.mxu0 %v281
    %945 = vmatprep.subr.mxu0 0.0
    %946 = vmatpush1.msra.mxu0 %v278
    %947 = vmatprep.subr.mxu0 0.0
    %948 = vmatpush2.msra.mxu0 0.0
    %949 = vmatprep.subr.mxu0 0.0
    %950 = vmatpush2.msra.mxu0 0.0
    %951 = vmatprep.subr.mxu0 0.0
    %952 = vmatpush2.msra.mxu0 0.0
    %953 = vmatprep.subr.mxu0 0.0
    %954 = vmatpush2.msra.mxu0 0.0
    %955 = vmatprep.subr.mxu0 0.0
    %956 = vmatpush2.msra.mxu0 0.0
    %957 = vmatprep.subr.mxu0 0.0
    %958 = vmatpush2.msra.mxu0 0.0
    %959 = vmatprep.subr.mxu0 0.0
    %960 = vmatpush2.msra.mxu0 0.0
    %961 = vmatprep.subr.mxu0 0.0
    %962 = vmatpush2.msra.mxu0 0.0
    %963 = vmatprep.subr.mxu0 0.0
    %964 = vmatpush2.msra.mxu0 0.0
    %965 = vmatprep.subr.mxu0 0.0
    %966 = vmatpush2.msra.mxu0 0.0
    %967 = vmatprep.subr.mxu0 0.0
    %968 = vmatpush2.msra.mxu0 0.0
    %969 = vmatprep.subr.mxu0 0.0
    %970 = vmatpush2.msra.mxu0 0.0
    %971 = vmatprep.subr.mxu0 0.0
    %972 = vmatpush2.msra.mxu0 0.0
    %973 = vmatprep.subr.mxu0 0.0
    %974 = vmatpush2.msra.mxu0 0.0
    %975 = vmatprep.subr.mxu0 0.0
    %976 = vmatpush2.msra.mxu0 0.0
    %977 = vmatprep.subr.mxu0 0.0
    %978 = vmatpush2.msra.mxu0 0.0
    %979 = vmatprep.mubr.f32.mxu0 0.0
    %980 = vmatmul.mubr.f32.gmra.mxu0 %v842
    %v981 = vpop.f32.mrf.mxu0
    %v982 = vadd.f32 0.0, %v981
    %v983 = vpop.f32.mrf.mxu0
    %984 = vdwg.mxu0
    %v986 = vrot.slane %v911, 5
    %v988 = vadd.f32 %v202, %v986
    %v989 = vxor.u32 %v988, 2147483648
    %v990 = vmul.f32 %v989, 1.442695
    %v991 = vpow.pop %v990
    %v992 = vadd.f32 %v991, 1.0
    %v993 = vrcp.pop %v992
    %v994 = vmul.f32 1.0, %v993
    %v996 = vrot.slane %v913, 5
    %v998 = vadd.f32 %v204, %v996
    %v999 = vxor.u32 %v998, 2147483648
    %v1000 = vmul.f32 %v999, 1.442695
    %v1001 = vpow.pop %v1000
    %v1002 = vadd.f32 %v1001, 1.0
    %v1003 = vrcp.pop %v1002
    %v1004 = vmul.f32 1.0, %v1003
    %v1005 = vadd.f32 %v982, %v324
    %v1007 = vrot.slane %v1005, 5
    %v1009 = vmul.f32 %v994, %v1007
    %v1010 = vadd.f32 %v273, %v1009
    %v1011 = vtanh.pop %v1010
    %v1012 = vsub.f32 1.0, %v1004
    %v1013 = vmul.f32 %v1012, %v1011
    %v1014 = vrot.slane %v840, 7
    %v1016 = vmul.f32 %v1004, %v1014
    %v1017 = vadd.f32 %v1013, %v1016
    %v1019 = vrot.slane %v1017, 3
    %1021 = vmatprep.subr.mxu0 %v322
    %1022 = vmatpush1.msra.mxu0 %v321
    %1023 = vmatprep.subr.mxu0 %v319
    %1024 = vmatpush1.msra.mxu0 %v318
    %1025 = vmatprep.subr.mxu0 %v316
    %1026 = vmatpush1.msra.mxu0 %v315
    %1027 = vmatprep.subr.mxu0 %v313
    %1028 = vmatpush1.msra.mxu0 %v312
    %1029 = vmatprep.subr.mxu0 %v310
    %1030 = vmatpush1.msra.mxu0 %v309
    %1031 = vmatprep.subr.mxu0 %v307
    %1032 = vmatpush1.msra.mxu0 %v306
    %1033 = vmatprep.subr.mxu0 %v304
    %1034 = vmatpush1.msra.mxu0 %v303
    %1035 = vmatprep.subr.mxu0 %v301
    %1036 = vmatpush1.msra.mxu0 %v300
    %1037 = vmatprep.subr.mxu0 %v298
    %1038 = vmatpush1.msra.mxu0 %v297
    %1039 = vmatprep.subr.mxu0 %v295
    %1040 = vmatpush1.msra.mxu0 %v294
    %1041 = vmatprep.subr.mxu0 %v292
    %1042 = vmatpush1.msra.mxu0 %v291
    %1043 = vmatprep.subr.mxu0 %v289
    %1044 = vmatpush1.msra.mxu0 %v288
    %1045 = vmatprep.subr.mxu0 %v286
    %1046 = vmatpush1.msra.mxu0 %v285
    %1047 = vmatprep.subr.mxu0 %v283
    %1048 = vmatpush1.msra.mxu0 %v282
    %1049 = vmatprep.subr.mxu0 %v280
    %1050 = vmatpush1.msra.mxu0 %v279
    %1051 = vmatprep.subr.mxu0 %v277
    %1052 = vmatpush1.msra.mxu0 %v276
    %1053 = vmatprep.subr.mxu0 0.0
    %1054 = vmatpush2.msra.mxu0 0.0
    %1055 = vmatprep.subr.mxu0 0.0
    %1056 = vmatpush2.msra.mxu0 0.0
    %1057 = vmatprep.subr.mxu0 0.0
    %1058 = vmatpush2.msra.mxu0 0.0
    %1059 = vmatprep.subr.mxu0 0.0
    %1060 = vmatpush2.msra.mxu0 0.0
    %1061 = vmatprep.subr.mxu0 0.0
    %1062 = vmatpush2.msra.mxu0 0.0
    %1063 = vmatprep.subr.mxu0 0.0
    %1064 = vmatpush2.msra.mxu0 0.0
    %1065 = vmatprep.subr.mxu0 0.0
    %1066 = vmatpush2.msra.mxu0 0.0
    %1067 = vmatprep.subr.mxu0 0.0
    %1068 = vmatpush2.msra.mxu0 0.0
    %1069 = vmatprep.subr.mxu0 0.0
    %1070 = vmatpush2.msra.mxu0 0.0
    %1071 = vmatprep.subr.mxu0 0.0
    %1072 = vmatpush2.msra.mxu0 0.0
    %1073 = vmatprep.subr.mxu0 0.0
    %1074 = vmatpush2.msra.mxu0 0.0
    %1075 = vmatprep.subr.mxu0 0.0
    %1076 = vmatpush2.msra.mxu0 0.0
    %1077 = vmatprep.subr.mxu0 0.0
    %1078 = vmatpush2.msra.mxu0 0.0
    %1079 = vmatprep.subr.mxu0 0.0
    %1080 = vmatpush2.msra.mxu0 0.0
    %1081 = vmatprep.subr.mxu0 0.0
    %1082 = vmatpush2.msra.mxu0 0.0
    %1083 = vmatprep.subr.mxu0 0.0
    %1084 = vmatpush2.msra.mxu0 0.0
    %1085 = vmatprep.mubr.f32.mxu0 0.0
    %1086 = vmatmul.mubr.f32.gmra.mxu0 %v1019
    %v1087 = vpop.f32.mrf.mxu0
    %v1088 = vadd.f32 0.0, %v1087
    %v1089 = vpop.f32.mrf.mxu0
    %v1090 = vadd.f32 0.0, %v1089
    %1091 = vdwg.mxu0
    %1092 = vmatprep.subr.mxu0 0.0
    %1093 = vmatpush1.msra.mxu0 %v323
    %1094 = vmatprep.subr.mxu0 0.0
    %1095 = vmatpush1.msra.mxu0 %v320
    %1096 = vmatprep.subr.mxu0 0.0
    %1097 = vmatpush1.msra.mxu0 %v317
    %1098 = vmatprep.subr.mxu0 0.0
    %1099 = vmatpush1.msra.mxu0 %v314
    %1100 = vmatprep.subr.mxu0 0.0
    %1101 = vmatpush1.msra.mxu0 %v311
    %1102 = vmatprep.subr.mxu0 0.0
    %1103 = vmatpush1.msra.mxu0 %v308
    %1104 = vmatprep.subr.mxu0 0.0
    %1105 = vmatpush1.msra.mxu0 %v305
    %1106 = vmatprep.subr.mxu0 0.0
    %1107 = vmatpush1.msra.mxu0 %v302
    %1108 = vmatprep.subr.mxu0 0.0
    %1109 = vmatpush1.msra.mxu0 %v299
    %1110 = vmatprep.subr.mxu0 0.0
    %1111 = vmatpush1.msra.mxu0 %v296
    %1112 = vmatprep.subr.mxu0 0.0
    %1113 = vmatpush1.msra.mxu0 %v293
    %1114 = vmatprep.subr.mxu0 0.0
    %1115 = vmatpush1.msra.mxu0 %v290
    %1116 = vmatprep.subr.mxu0 0.0
    %1117 = vmatpush1.msra.mxu0 %v287
    %1118 = vmatprep.subr.mxu0 0.0
    %1119 = vmatpush1.msra.mxu0 %v284
    %1120 = vmatprep.subr.mxu0 0.0
    %1121 = vmatpush1.msra.mxu0 %v281
    %1122 = vmatprep.subr.mxu0 0.0
    %1123 = vmatpush1.msra.mxu0 %v278
    %1124 = vmatprep.subr.mxu0 0.0
    %1125 = vmatpush2.msra.mxu0 0.0
    %1126 = vmatprep.subr.mxu0 0.0
    %1127 = vmatpush2.msra.mxu0 0.0
    %1128 = vmatprep.subr.mxu0 0.0
    %1129 = vmatpush2.msra.mxu0 0.0
    %1130 = vmatprep.subr.mxu0 0.0
    %1131 = vmatpush2.msra.mxu0 0.0
    %1132 = vmatprep.subr.mxu0 0.0
    %1133 = vmatpush2.msra.mxu0 0.0
    %1134 = vmatprep.subr.mxu0 0.0
    %1135 = vmatpush2.msra.mxu0 0.0
    %1136 = vmatprep.subr.mxu0 0.0
    %1137 = vmatpush2.msra.mxu0 0.0
    %1138 = vmatprep.subr.mxu0 0.0
    %1139 = vmatpush2.msra.mxu0 0.0
    %1140 = vmatprep.subr.mxu0 0.0
    %1141 = vmatpush2.msra.mxu0 0.0
    %1142 = vmatprep.subr.mxu0 0.0
    %1143 = vmatpush2.msra.mxu0 0.0
    %1144 = vmatprep.subr.mxu0 0.0
    %1145 = vmatpush2.msra.mxu0 0.0
    %1146 = vmatprep.subr.mxu0 0.0
    %1147 = vmatpush2.msra.mxu0 0.0
    %1148 = vmatprep.subr.mxu0 0.0
    %1149 = vmatpush2.msra.mxu0 0.0
    %1150 = vmatprep.subr.mxu0 0.0
    %1151 = vmatpush2.msra.mxu0 0.0
    %1152 = vmatprep.subr.mxu0 0.0
    %1153 = vmatpush2.msra.mxu0 0.0
    %1154 = vmatprep.subr.mxu0 0.0
    %1155 = vmatpush2.msra.mxu0 0.0
    %1156 = vmatprep.mubr.f32.mxu0 0.0
    %1157 = vmatmul.mubr.f32.gmra.mxu0 %v1019
    %v1158 = vpop.f32.mrf.mxu0
    %v1159 = vadd.f32 0.0, %v1158
    %v1160 = vpop.f32.mrf.mxu0
    %1161 = vdwg.mxu0
    %v1163 = vrot.slane %v1088, 4
    %v1165 = vadd.f32 %v202, %v1163
    %v1166 = vxor.u32 %v1165, 2147483648
    %v1167 = vmul.f32 %v1166, 1.442695
    %v1168 = vpow.pop %v1167
    %v1169 = vadd.f32 %v1168, 1.0
    %v1170 = vrcp.pop %v1169
    %v1171 = vmul.f32 1.0, %v1170
    %v1173 = vrot.slane %v1090, 4
    %v1175 = vadd.f32 %v204, %v1173
    %v1176 = vxor.u32 %v1175, 2147483648
    %v1177 = vmul.f32 %v1176, 1.442695
    %v1178 = vpow.pop %v1177
    %v1179 = vadd.f32 %v1178, 1.0
    %v1180 = vrcp.pop %v1179
    %v1181 = vmul.f32 1.0, %v1180
    %v1182 = vadd.f32 %v1159, %v324
    %v1184 = vrot.slane %v1182, 4
    %v1186 = vmul.f32 %v1171, %v1184
    %v1187 = vadd.f32 %v273, %v1186
    %v1188 = vtanh.pop %v1187
    %v1189 = vsub.f32 1.0, %v1181
    %v1190 = vmul.f32 %v1189, %v1188
    %v1191 = vrot.slane %v1017, 7
    %v1193 = vmul.f32 %v1181, %v1191
    %v1194 = vadd.f32 %v1190, %v1193
    %v1196 = vrot.slane %v1194, 4
    %1198 = vmatprep.subr.mxu0 %v322
    %1199 = vmatpush1.msra.mxu0 %v321
    %1200 = vmatprep.subr.mxu0 %v319
    %1201 = vmatpush1.msra.mxu0 %v318
    %1202 = vmatprep.subr.mxu0 %v316
    %1203 = vmatpush1.msra.mxu0 %v315
    %1204 = vmatprep.subr.mxu0 %v313
    %1205 = vmatpush1.msra.mxu0 %v312
    %1206 = vmatprep.subr.mxu0 %v310
    %1207 = vmatpush1.msra.mxu0 %v309
    %1208 = vmatprep.subr.mxu0 %v307
    %1209 = vmatpush1.msra.mxu0 %v306
    %1210 = vmatprep.subr.mxu0 %v304
    %1211 = vmatpush1.msra.mxu0 %v303
    %1212 = vmatprep.subr.mxu0 %v301
    %1213 = vmatpush1.msra.mxu0 %v300
    %1214 = vmatprep.subr.mxu0 %v298
    %1215 = vmatpush1.msra.mxu0 %v297
    %1216 = vmatprep.subr.mxu0 %v295
    %1217 = vmatpush1.msra.mxu0 %v294
    %1218 = vmatprep.subr.mxu0 %v292
    %1219 = vmatpush1.msra.mxu0 %v291
    %1220 = vmatprep.subr.mxu0 %v289
    %1221 = vmatpush1.msra.mxu0 %v288
    %1222 = vmatprep.subr.mxu0 %v286
    %1223 = vmatpush1.msra.mxu0 %v285
    %1224 = vmatprep.subr.mxu0 %v283
    %1225 = vmatpush1.msra.mxu0 %v282
    %1226 = vmatprep.subr.mxu0 %v280
    %1227 = vmatpush1.msra.mxu0 %v279
    %1228 = vmatprep.subr.mxu0 %v277
    %1229 = vmatpush1.msra.mxu0 %v276
    %1230 = vmatprep.subr.mxu0 0.0
    %1231 = vmatpush2.msra.mxu0 0.0
    %1232 = vmatprep.subr.mxu0 0.0
    %1233 = vmatpush2.msra.mxu0 0.0
    %1234 = vmatprep.subr.mxu0 0.0
    %1235 = vmatpush2.msra.mxu0 0.0
    %1236 = vmatprep.subr.mxu0 0.0
    %1237 = vmatpush2.msra.mxu0 0.0
    %1238 = vmatprep.subr.mxu0 0.0
    %1239 = vmatpush2.msra.mxu0 0.0
    %1240 = vmatprep.subr.mxu0 0.0
    %1241 = vmatpush2.msra.mxu0 0.0
    %1242 = vmatprep.subr.mxu0 0.0
    %1243 = vmatpush2.msra.mxu0 0.0
    %1244 = vmatprep.subr.mxu0 0.0
    %1245 = vmatpush2.msra.mxu0 0.0
    %1246 = vmatprep.subr.mxu0 0.0
    %1247 = vmatpush2.msra.mxu0 0.0
    %1248 = vmatprep.subr.mxu0 0.0
    %1249 = vmatpush2.msra.mxu0 0.0
    %1250 = vmatprep.subr.mxu0 0.0
    %1251 = vmatpush2.msra.mxu0 0.0
    %1252 = vmatprep.subr.mxu0 0.0
    %1253 = vmatpush2.msra.mxu0 0.0
    %1254 = vmatprep.subr.mxu0 0.0
    %1255 = vmatpush2.msra.mxu0 0.0
    %1256 = vmatprep.subr.mxu0 0.0
    %1257 = vmatpush2.msra.mxu0 0.0
    %1258 = vmatprep.subr.mxu0 0.0
    %1259 = vmatpush2.msra.mxu0 0.0
    %1260 = vmatprep.subr.mxu0 0.0
    %1261 = vmatpush2.msra.mxu0 0.0
    %1262 = vmatprep.mubr.f32.mxu0 0.0
    %1263 = vmatmul.mubr.f32.gmra.mxu0 %v1196
    %v1264 = vpop.f32.mrf.mxu0
    %v1265 = vadd.f32 0.0, %v1264
    %v1266 = vpop.f32.mrf.mxu0
    %v1267 = vadd.f32 0.0, %v1266
    %1268 = vdwg.mxu0
    %1269 = vmatprep.subr.mxu0 0.0
    %1270 = vmatpush1.msra.mxu0 %v323
    %1271 = vmatprep.subr.mxu0 0.0
    %1272 = vmatpush1.msra.mxu0 %v320
    %1273 = vmatprep.subr.mxu0 0.0
    %1274 = vmatpush1.msra.mxu0 %v317
    %1275 = vmatprep.subr.mxu0 0.0
    %1276 = vmatpush1.msra.mxu0 %v314
    %1277 = vmatprep.subr.mxu0 0.0
    %1278 = vmatpush1.msra.mxu0 %v311
    %1279 = vmatprep.subr.mxu0 0.0
    %1280 = vmatpush1.msra.mxu0 %v308
    %1281 = vmatprep.subr.mxu0 0.0
    %1282 = vmatpush1.msra.mxu0 %v305
    %1283 = vmatprep.subr.mxu0 0.0
    %1284 = vmatpush1.msra.mxu0 %v302
    %1285 = vmatprep.subr.mxu0 0.0
    %1286 = vmatpush1.msra.mxu0 %v299
    %1287 = vmatprep.subr.mxu0 0.0
    %1288 = vmatpush1.msra.mxu0 %v296
    %1289 = vmatprep.subr.mxu0 0.0
    %1290 = vmatpush1.msra.mxu0 %v293
    %1291 = vmatprep.subr.mxu0 0.0
    %1292 = vmatpush1.msra.mxu0 %v290
    %1293 = vmatprep.subr.mxu0 0.0
    %1294 = vmatpush1.msra.mxu0 %v287
    %1295 = vmatprep.subr.mxu0 0.0
    %1296 = vmatpush1.msra.mxu0 %v284
    %1297 = vmatprep.subr.mxu0 0.0
    %1298 = vmatpush1.msra.mxu0 %v281
    %1299 = vmatprep.subr.mxu0 0.0
    %1300 = vmatpush1.msra.mxu0 %v278
    %1301 = vmatprep.subr.mxu0 0.0
    %1302 = vmatpush2.msra.mxu0 0.0
    %1303 = vmatprep.subr.mxu0 0.0
    %1304 = vmatpush2.msra.mxu0 0.0
    %1305 = vmatprep.subr.mxu0 0.0
    %1306 = vmatpush2.msra.mxu0 0.0
    %1307 = vmatprep.subr.mxu0 0.0
    %1308 = vmatpush2.msra.mxu0 0.0
    %1309 = vmatprep.subr.mxu0 0.0
    %1310 = vmatpush2.msra.mxu0 0.0
    %1311 = vmatprep.subr.mxu0 0.0
    %1312 = vmatpush2.msra.mxu0 0.0
    %1313 = vmatprep.subr.mxu0 0.0
    %1314 = vmatpush2.msra.mxu0 0.0
    %1315 = vmatprep.subr.mxu0 0.0
    %1316 = vmatpush2.msra.mxu0 0.0
    %1317 = vmatprep.subr.mxu0 0.0
    %1318 = vmatpush2.msra.mxu0 0.0
    %1319 = vmatprep.subr.mxu0 0.0
    %1320 = vmatpush2.msra.mxu0 0.0
    %1321 = vmatprep.subr.mxu0 0.0
    %1322 = vmatpush2.msra.mxu0 0.0
    %1323 = vmatprep.subr.mxu0 0.0
    %1324 = vmatpush2.msra.mxu0 0.0
    %1325 = vmatprep.subr.mxu0 0.0
    %1326 = vmatpush2.msra.mxu0 0.0
    %1327 = vmatprep.subr.mxu0 0.0
    %1328 = vmatpush2.msra.mxu0 0.0
    %1329 = vmatprep.subr.mxu0 0.0
    %1330 = vmatpush2.msra.mxu0 0.0
    %1331 = vmatprep.subr.mxu0 0.0
    %1332 = vmatpush2.msra.mxu0 0.0
    %1333 = vmatprep.mubr.f32.mxu0 0.0
    %1334 = vmatmul.mubr.f32.gmra.mxu0 %v1196
    %v1335 = vpop.f32.mrf.mxu0
    %v1336 = vadd.f32 0.0, %v1335
    %v1337 = vpop.f32.mrf.mxu0
    %1338 = vdwg.mxu0
    %v1340 = vrot.slane %v1265, 3
    %v1342 = vadd.f32 %v202, %v1340
    %v1343 = vxor.u32 %v1342, 2147483648
    %v1344 = vmul.f32 %v1343, 1.442695
    %v1345 = vpow.pop %v1344
    %v1346 = vadd.f32 %v1345, 1.0
    %v1347 = vrcp.pop %v1346
    %v1348 = vmul.f32 1.0, %v1347
    %v1350 = vrot.slane %v1267, 3
    %v1352 = vadd.f32 %v204, %v1350
    %v1353 = vxor.u32 %v1352, 2147483648
    %v1354 = vmul.f32 %v1353, 1.442695
    %v1355 = vpow.pop %v1354
    %v1356 = vadd.f32 %v1355, 1.0
    %v1357 = vrcp.pop %v1356
    %v1358 = vmul.f32 1.0, %v1357
    %v1359 = vadd.f32 %v1336, %v324
    %v1361 = vrot.slane %v1359, 3
    %v1363 = vmul.f32 %v1348, %v1361
    %v1364 = vadd.f32 %v273, %v1363
    %v1365 = vtanh.pop %v1364
    %v1366 = vsub.f32 1.0, %v1358
    %v1367 = vmul.f32 %v1366, %v1365
    %v1368 = vrot.slane %v1194, 7
    %v1370 = vmul.f32 %v1358, %v1368
    %v1371 = vadd.f32 %v1367, %v1370
    %v1373 = vrot.slane %v1371, 5
    %1375 = vmatprep.subr.mxu0 %v322
    %1376 = vmatpush1.msra.mxu0 %v321
    %1377 = vmatprep.subr.mxu0 %v319
    %1378 = vmatpush1.msra.mxu0 %v318
    %1379 = vmatprep.subr.mxu0 %v316
    %1380 = vmatpush1.msra.mxu0 %v315
    %1381 = vmatprep.subr.mxu0 %v313
    %1382 = vmatpush1.msra.mxu0 %v312
    %1383 = vmatprep.subr.mxu0 %v310
    %1384 = vmatpush1.msra.mxu0 %v309
    %1385 = vmatprep.subr.mxu0 %v307
    %1386 = vmatpush1.msra.mxu0 %v306
    %1387 = vmatprep.subr.mxu0 %v304
    %1388 = vmatpush1.msra.mxu0 %v303
    %1389 = vmatprep.subr.mxu0 %v301
    %1390 = vmatpush1.msra.mxu0 %v300
    %1391 = vmatprep.subr.mxu0 %v298
    %1392 = vmatpush1.msra.mxu0 %v297
    %1393 = vmatprep.subr.mxu0 %v295
    %1394 = vmatpush1.msra.mxu0 %v294
    %1395 = vmatprep.subr.mxu0 %v292
    %1396 = vmatpush1.msra.mxu0 %v291
    %1397 = vmatprep.subr.mxu0 %v289
    %1398 = vmatpush1.msra.mxu0 %v288
    %1399 = vmatprep.subr.mxu0 %v286
    %1400 = vmatpush1.msra.mxu0 %v285
    %1401 = vmatprep.subr.mxu0 %v283
    %1402 = vmatpush1.msra.mxu0 %v282
    %1403 = vmatprep.subr.mxu0 %v280
    %1404 = vmatpush1.msra.mxu0 %v279
    %1405 = vmatprep.subr.mxu0 %v277
    %1406 = vmatpush1.msra.mxu0 %v276
    %1407 = vmatprep.subr.mxu0 0.0
    %1408 = vmatpush2.msra.mxu0 0.0
    %1409 = vmatprep.subr.mxu0 0.0
    %1410 = vmatpush2.msra.mxu0 0.0
    %1411 = vmatprep.subr.mxu0 0.0
    %1412 = vmatpush2.msra.mxu0 0.0
    %1413 = vmatprep.subr.mxu0 0.0
    %1414 = vmatpush2.msra.mxu0 0.0
    %1415 = vmatprep.subr.mxu0 0.0
    %1416 = vmatpush2.msra.mxu0 0.0
    %1417 = vmatprep.subr.mxu0 0.0
    %1418 = vmatpush2.msra.mxu0 0.0
    %1419 = vmatprep.subr.mxu0 0.0
    %1420 = vmatpush2.msra.mxu0 0.0
    %1421 = vmatprep.subr.mxu0 0.0
    %1422 = vmatpush2.msra.mxu0 0.0
    %1423 = vmatprep.subr.mxu0 0.0
    %1424 = vmatpush2.msra.mxu0 0.0
    %1425 = vmatprep.subr.mxu0 0.0
    %1426 = vmatpush2.msra.mxu0 0.0
    %1427 = vmatprep.subr.mxu0 0.0
    %1428 = vmatpush2.msra.mxu0 0.0
    %1429 = vmatprep.subr.mxu0 0.0
    %1430 = vmatpush2.msra.mxu0 0.0
    %1431 = vmatprep.subr.mxu0 0.0
    %1432 = vmatpush2.msra.mxu0 0.0
    %1433 = vmatprep.subr.mxu0 0.0
    %1434 = vmatpush2.msra.mxu0 0.0
    %1435 = vmatprep.subr.mxu0 0.0
    %1436 = vmatpush2.msra.mxu0 0.0
    %1437 = vmatprep.subr.mxu0 0.0
    %1438 = vmatpush2.msra.mxu0 0.0
    %1439 = vmatprep.mubr.f32.mxu0 0.0
    %1440 = vmatmul.mubr.f32.gmra.mxu0 %v1373
    %v1441 = vpop.f32.mrf.mxu0
    %v1442 = vadd.f32 0.0, %v1441
    %v1443 = vpop.f32.mrf.mxu0
    %v1444 = vadd.f32 0.0, %v1443
    %1445 = vdwg.mxu0
    %1446 = vmatprep.subr.mxu0 0.0
    %1447 = vmatpush1.msra.mxu0 %v323
    %1448 = vmatprep.subr.mxu0 0.0
    %1449 = vmatpush1.msra.mxu0 %v320
    %1450 = vmatprep.subr.mxu0 0.0
    %1451 = vmatpush1.msra.mxu0 %v317
    %1452 = vmatprep.subr.mxu0 0.0
    %1453 = vmatpush1.msra.mxu0 %v314
    %1454 = vmatprep.subr.mxu0 0.0
    %1455 = vmatpush1.msra.mxu0 %v311
    %1456 = vmatprep.subr.mxu0 0.0
    %1457 = vmatpush1.msra.mxu0 %v308
    %1458 = vmatprep.subr.mxu0 0.0
    %1459 = vmatpush1.msra.mxu0 %v305
    %1460 = vmatprep.subr.mxu0 0.0
    %1461 = vmatpush1.msra.mxu0 %v302
    %1462 = vmatprep.subr.mxu0 0.0
    %1463 = vmatpush1.msra.mxu0 %v299
    %1464 = vmatprep.subr.mxu0 0.0
    %1465 = vmatpush1.msra.mxu0 %v296
    %1466 = vmatprep.subr.mxu0 0.0
    %1467 = vmatpush1.msra.mxu0 %v293
    %1468 = vmatprep.subr.mxu0 0.0
    %1469 = vmatpush1.msra.mxu0 %v290
    %1470 = vmatprep.subr.mxu0 0.0
    %1471 = vmatpush1.msra.mxu0 %v287
    %1472 = vmatprep.subr.mxu0 0.0
    %1473 = vmatpush1.msra.mxu0 %v284
    %1474 = vmatprep.subr.mxu0 0.0
    %1475 = vmatpush1.msra.mxu0 %v281
    %1476 = vmatprep.subr.mxu0 0.0
    %1477 = vmatpush1.msra.mxu0 %v278
    %1478 = vmatprep.subr.mxu0 0.0
    %1479 = vmatpush2.msra.mxu0 0.0
    %1480 = vmatprep.subr.mxu0 0.0
    %1481 = vmatpush2.msra.mxu0 0.0
    %1482 = vmatprep.subr.mxu0 0.0
    %1483 = vmatpush2.msra.mxu0 0.0
    %1484 = vmatprep.subr.mxu0 0.0
    %1485 = vmatpush2.msra.mxu0 0.0
    %1486 = vmatprep.subr.mxu0 0.0
    %1487 = vmatpush2.msra.mxu0 0.0
    %1488 = vmatprep.subr.mxu0 0.0
    %1489 = vmatpush2.msra.mxu0 0.0
    %1490 = vmatprep.subr.mxu0 0.0
    %1491 = vmatpush2.msra.mxu0 0.0
    %1492 = vmatprep.subr.mxu0 0.0
    %1493 = vmatpush2.msra.mxu0 0.0
    %1494 = vmatprep.subr.mxu0 0.0
    %1495 = vmatpush2.msra.mxu0 0.0
    %1496 = vmatprep.subr.mxu0 0.0
    %1497 = vmatpush2.msra.mxu0 0.0
    %1498 = vmatprep.subr.mxu0 0.0
    %1499 = vmatpush2.msra.mxu0 0.0
    %1500 = vmatprep.subr.mxu0 0.0
    %1501 = vmatpush2.msra.mxu0 0.0
    %1502 = vmatprep.subr.mxu0 0.0
    %1503 = vmatpush2.msra.mxu0 0.0
    %1504 = vmatprep.subr.mxu0 0.0
    %1505 = vmatpush2.msra.mxu0 0.0
    %1506 = vmatprep.subr.mxu0 0.0
    %1507 = vmatpush2.msra.mxu0 0.0
    %1508 = vmatprep.subr.mxu0 0.0
    %1509 = vmatpush2.msra.mxu0 0.0
    %1510 = vmatprep.mubr.f32.mxu0 0.0
    %1511 = vmatmul.mubr.f32.gmra.mxu0 %v1373
    %v1512 = vpop.f32.mrf.mxu0
    %v1513 = vadd.f32 0.0, %v1512
    %v1514 = vpop.f32.mrf.mxu0
    %1515 = vdwg.mxu0
    %v1517 = vrot.slane %v1442, 2
    %v1519 = vadd.f32 %v202, %v1517
    %v1520 = vxor.u32 %v1519, 2147483648
    %v1521 = vmul.f32 %v1520, 1.442695
    %v1522 = vpow.pop %v1521
    %v1523 = vadd.f32 %v1522, 1.0
    %v1524 = vrcp.pop %v1523
    %v1525 = vmul.f32 1.0, %v1524
    %v1527 = vrot.slane %v1444, 2
    %v1529 = vadd.f32 %v204, %v1527
    %v1530 = vxor.u32 %v1529, 2147483648
    %v1531 = vmul.f32 %v1530, 1.442695
    %v1532 = vpow.pop %v1531
    %v1533 = vadd.f32 %v1532, 1.0
    %v1534 = vrcp.pop %v1533
    %v1535 = vmul.f32 1.0, %v1534
    %v1536 = vadd.f32 %v1513, %v324
    %v1538 = vrot.slane %v1536, 2
    %v1540 = vmul.f32 %v1525, %v1538
    %v1541 = vadd.f32 %v273, %v1540
    %v1542 = vtanh.pop %v1541
    %v1543 = vsub.f32 1.0, %v1535
    %v1544 = vmul.f32 %v1543, %v1542
    %v1545 = vrot.slane %v1371, 7
    %v1547 = vmul.f32 %v1535, %v1545
    %v1548 = vadd.f32 %v1544, %v1547
    %v1550 = vrot.slane %v1548, 6
    %1552 = vmatprep.subr.mxu0 %v322
    %1553 = vmatpush1.msra.mxu0 %v321
    %1554 = vmatprep.subr.mxu0 %v319
    %1555 = vmatpush1.msra.mxu0 %v318
    %1556 = vmatprep.subr.mxu0 %v316
    %1557 = vmatpush1.msra.mxu0 %v315
    %1558 = vmatprep.subr.mxu0 %v313
    %1559 = vmatpush1.msra.mxu0 %v312
    %1560 = vmatprep.subr.mxu0 %v310
    %1561 = vmatpush1.msra.mxu0 %v309
    %1562 = vmatprep.subr.mxu0 %v307
    %1563 = vmatpush1.msra.mxu0 %v306
    %1564 = vmatprep.subr.mxu0 %v304
    %1565 = vmatpush1.msra.mxu0 %v303
    %1566 = vmatprep.subr.mxu0 %v301
    %1567 = vmatpush1.msra.mxu0 %v300
    %1568 = vmatprep.subr.mxu0 %v298
    %1569 = vmatpush1.msra.mxu0 %v297
    %1570 = vmatprep.subr.mxu0 %v295
    %1571 = vmatpush1.msra.mxu0 %v294
    %1572 = vmatprep.subr.mxu0 %v292
    %1573 = vmatpush1.msra.mxu0 %v291
    %1574 = vmatprep.subr.mxu0 %v289
    %1575 = vmatpush1.msra.mxu0 %v288
    %1576 = vmatprep.subr.mxu0 %v286
    %1577 = vmatpush1.msra.mxu0 %v285
    %1578 = vmatprep.subr.mxu0 %v283
    %1579 = vmatpush1.msra.mxu0 %v282
    %1580 = vmatprep.subr.mxu0 %v280
    %1581 = vmatpush1.msra.mxu0 %v279
    %1582 = vmatprep.subr.mxu0 %v277
    %1583 = vmatpush1.msra.mxu0 %v276
    %1584 = vmatprep.subr.mxu0 0.0
    %1585 = vmatpush2.msra.mxu0 0.0
    %1586 = vmatprep.subr.mxu0 0.0
    %1587 = vmatpush2.msra.mxu0 0.0
    %1588 = vmatprep.subr.mxu0 0.0
    %1589 = vmatpush2.msra.mxu0 0.0
    %1590 = vmatprep.subr.mxu0 0.0
    %1591 = vmatpush2.msra.mxu0 0.0
    %1592 = vmatprep.subr.mxu0 0.0
    %1593 = vmatpush2.msra.mxu0 0.0
    %1594 = vmatprep.subr.mxu0 0.0
    %1595 = vmatpush2.msra.mxu0 0.0
    %1596 = vmatprep.subr.mxu0 0.0
    %1597 = vmatpush2.msra.mxu0 0.0
    %1598 = vmatprep.subr.mxu0 0.0
    %1599 = vmatpush2.msra.mxu0 0.0
    %1600 = vmatprep.subr.mxu0 0.0
    %1601 = vmatpush2.msra.mxu0 0.0
    %1602 = vmatprep.subr.mxu0 0.0
    %1603 = vmatpush2.msra.mxu0 0.0
    %1604 = vmatprep.subr.mxu0 0.0
    %1605 = vmatpush2.msra.mxu0 0.0
    %1606 = vmatprep.subr.mxu0 0.0
    %1607 = vmatpush2.msra.mxu0 0.0
    %1608 = vmatprep.subr.mxu0 0.0
    %1609 = vmatpush2.msra.mxu0 0.0
    %1610 = vmatprep.subr.mxu0 0.0
    %1611 = vmatpush2.msra.mxu0 0.0
    %1612 = vmatprep.subr.mxu0 0.0
    %1613 = vmatpush2.msra.mxu0 0.0
    %1614 = vmatprep.subr.mxu0 0.0
    %1615 = vmatpush2.msra.mxu0 0.0
    %1616 = vmatprep.mubr.f32.mxu0 0.0
    %1617 = vmatmul.mubr.f32.gmra.mxu0 %v1550
    %v1618 = vpop.f32.mrf.mxu0
    %v1619 = vadd.f32 0.0, %v1618
    %v1620 = vpop.f32.mrf.mxu0
    %v1621 = vadd.f32 0.0, %v1620
    %1622 = vdwg.mxu0
    %1623 = vmatprep.subr.mxu0 0.0
    %1624 = vmatpush1.msra.mxu0 %v323
    %1625 = vmatprep.subr.mxu0 0.0
    %1626 = vmatpush1.msra.mxu0 %v320
    %1627 = vmatprep.subr.mxu0 0.0
    %1628 = vmatpush1.msra.mxu0 %v317
    %1629 = vmatprep.subr.mxu0 0.0
    %1630 = vmatpush1.msra.mxu0 %v314
    %1631 = vmatprep.subr.mxu0 0.0
    %1632 = vmatpush1.msra.mxu0 %v311
    %1633 = vmatprep.subr.mxu0 0.0
    %1634 = vmatpush1.msra.mxu0 %v308
    %1635 = vmatprep.subr.mxu0 0.0
    %1636 = vmatpush1.msra.mxu0 %v305
    %1637 = vmatprep.subr.mxu0 0.0
    %1638 = vmatpush1.msra.mxu0 %v302
    %1639 = vmatprep.subr.mxu0 0.0
    %1640 = vmatpush1.msra.mxu0 %v299
    %1641 = vmatprep.subr.mxu0 0.0
    %1642 = vmatpush1.msra.mxu0 %v296
    %1643 = vmatprep.subr.mxu0 0.0
    %1644 = vmatpush1.msra.mxu0 %v293
    %1645 = vmatprep.subr.mxu0 0.0
    %1646 = vmatpush1.msra.mxu0 %v290
    %1647 = vmatprep.subr.mxu0 0.0
    %1648 = vmatpush1.msra.mxu0 %v287
    %1649 = vmatprep.subr.mxu0 0.0
    %1650 = vmatpush1.msra.mxu0 %v284
    %1651 = vmatprep.subr.mxu0 0.0
    %1652 = vmatpush1.msra.mxu0 %v281
    %1653 = vmatprep.subr.mxu0 0.0
    %1654 = vmatpush1.msra.mxu0 %v278
    %1655 = vmatprep.subr.mxu0 0.0
    %1656 = vmatpush2.msra.mxu0 0.0
    %1657 = vmatprep.subr.mxu0 0.0
    %1658 = vmatpush2.msra.mxu0 0.0
    %1659 = vmatprep.subr.mxu0 0.0
    %1660 = vmatpush2.msra.mxu0 0.0
    %1661 = vmatprep.subr.mxu0 0.0
    %1662 = vmatpush2.msra.mxu0 0.0
    %1663 = vmatprep.subr.mxu0 0.0
    %1664 = vmatpush2.msra.mxu0 0.0
    %1665 = vmatprep.subr.mxu0 0.0
    %1666 = vmatpush2.msra.mxu0 0.0
    %1667 = vmatprep.subr.mxu0 0.0
    %1668 = vmatpush2.msra.mxu0 0.0
    %1669 = vmatprep.subr.mxu0 0.0
    %1670 = vmatpush2.msra.mxu0 0.0
    %1671 = vmatprep.subr.mxu0 0.0
    %1672 = vmatpush2.msra.mxu0 0.0
    %1673 = vmatprep.subr.mxu0 0.0
    %1674 = vmatpush2.msra.mxu0 0.0
    %1675 = vmatprep.subr.mxu0 0.0
    %1676 = vmatpush2.msra.mxu0 0.0
    %1677 = vmatprep.subr.mxu0 0.0
    %1678 = vmatpush2.msra.mxu0 0.0
    %1679 = vmatprep.subr.mxu0 0.0
    %1680 = vmatpush2.msra.mxu0 0.0
    %1681 = vmatprep.subr.mxu0 0.0
    %1682 = vmatpush2.msra.mxu0 0.0
    %1683 = vmatprep.subr.mxu0 0.0
    %1684 = vmatpush2.msra.mxu0 0.0
    %1685 = vmatprep.subr.mxu0 0.0
    %1686 = vmatpush2.msra.mxu0 0.0
    %1687 = vmatprep.mubr.f32.mxu0 0.0
    %1688 = vmatmul.mubr.f32.gmra.mxu0 %v1550
    %v1689 = vpop.f32.mrf.mxu0
    %v1690 = vadd.f32 0.0, %v1689
    %v1691 = vpop.f32.mrf.mxu0
    %1692 = vdwg.mxu0
    %v1694 = vrot.slane %v1619, 1
    %v1696 = vadd.f32 %v202, %v1694
    %v1697 = vxor.u32 %v1696, 2147483648
    %v1698 = vmul.f32 %v1697, 1.442695
    %v1699 = vpow.pop %v1698
    %v1700 = vadd.f32 %v1699, 1.0
    %v1701 = vrcp.pop %v1700
    %v1702 = vmul.f32 1.0, %v1701
    %v1704 = vrot.slane %v1621, 1
    %v1706 = vadd.f32 %v204, %v1704
    %v1707 = vxor.u32 %v1706, 2147483648
    %v1708 = vmul.f32 %v1707, 1.442695
    %v1709 = vpow.pop %v1708
    %v1710 = vadd.f32 %v1709, 1.0
    %v1711 = vrcp.pop %v1710
    %v1712 = vmul.f32 1.0, %v1711
    %v1713 = vadd.f32 %v1690, %v324
    %v1715 = vrot.slane %v1713, 1
    %v1717 = vmul.f32 %v1702, %v1715
    %v1718 = vadd.f32 %v273, %v1717
    %v1719 = vtanh.pop %v1718
    %v1720 = vsub.f32 1.0, %v1712
    %v1721 = vmul.f32 %v1720, %v1719
    %v1722 = vrot.slane %v1548, 7
    %v1724 = vmul.f32 %v1712, %v1722
    %v1725 = vadd.f32 %v1721, %v1724
    %vm1726 = vcmask 1040384
    %v1727 = vsel %vm1726, %v488, %v663
    %vm1728 = vcmask 1041408
    %v1729 = vsel %vm1728, %v1727, %v840
    %vm1730 = vcmask 1042432
    %v1731 = vsel %vm1730, %v1729, %v1017
    %vm1732 = vcmask 1043456
    %v1733 = vsel %vm1732, %v1731, %v1194
    %vm1734 = vcmask 1044480
    %v1735 = vsel %vm1734, %v1733, %v1371
    %vm1736 = vcmask 1045504
    %v1737 = vsel %vm1736, %v1735, %v1548
    %vm1738 = vcmask 1046528
    %v1739 = vsel %vm1738, %v1737, %v1725
    %1740 = vst [vmem:[#allocation9] sm:$0xff] %v1739
    %1741 = vst [vmem:[#allocation2 - $0x7] sm:$0x80] %v1725
    // Predicated region
    $region42: #{tpu_custom_call.1} parent=1 // pred_check
      _
    $region43: #{tpu_custom_call.1} parent=1 // pred_check_branch
      %1743 = sbr.rel (0) target = $region45
    $region44: #{tpu_custom_call.1} parent=1 // pred_region
      %s1745 = ssub.s32 128, 128
      %1746 = vsyncadd [#allocation5], %s1745
      %s1748 = sshll.u32 [#allocation9], 4
      %s1749 = int_to_ptr.vmem [resolvable:$true] %s1748
      %1751 = dma.vmem_to_hbm [thread:$0]  %s1749, 128, %s6, [#allocation5]
    $region45: #{tpu_custom_call.1} parent=1 // pred_fallthru
      _
    // Predicated region
    $region46: #{tpu_custom_call.1} parent=1 // pred_check
      _
    $region47: #{tpu_custom_call.1} parent=1 // pred_check_branch
      %1753 = sbr.rel (0) target = $region49
    $region48: #{tpu_custom_call.1} parent=1 // pred_region
      %1754 = dma.done [#allocation5], 128
    $region49: #{tpu_custom_call.1} parent=1 // pred_fallthru
      _
    %1755 = vsyncpa [#allocation4], 1
    %1756 = vsyncpa [#allocation7], 1
    %1757 = vsyncpa [#allocation5], 1

</llo_original>
